<compile_context>
chip_gen: v5e
topology: v5e:2x2
jax: 0.10.0
libtpu: 0.0.40
codegen_flags: <defaults>
</compile_context>

<pallas_src>
import math

import jax
import jax.numpy as jnp
from jax import lax
from jax.experimental import pallas as pl
from jax.experimental.pallas import tpu as pltpu

HIDDEN_SIZE = 48
INPUT_SIZE = 7          # Conv1d input length
CONV_OUT = 6            # conv out_channels == LSTM "batch"
CP = 8                  # conv channels padded to a full sublane group
KSIZE = 3
LSTM_IN = INPUT_SIZE - KSIZE + 1   # 5
SEQ = 8                 # number of samples == LSTM sequence length


def lstm_conv_kernel(x_ref, wconv_ref, wih_t_ref, whh_t_ref, gbias_ref,
                     w12_ref, b12_ref, out_ref):
    SR, L = x_ref.shape              # (S*R, 7)   rows ordered (step, batch, channel)
    K = wconv_ref.shape[1]           # 3
    T = L - K + 1                    # 5
    H = whh_t_ref.shape[0]           # 48
    R = w12_ref.shape[0]             # rows per step = B*CP
    S = SR // R                      # sequence length
    B = out_ref.shape[1]             # number of independent sequences
    CPL = R // B                     # padded channels per sequence (8)

    x = x_ref[...]                   # (S*R, L)
    wconv = wconv_ref[...]           # (S*R, K)  per-row conv weights (zero for pad rows)

    # ---- Conv1d(in=1, out=C, k=K) on 2D rows (no bias here: bconv folded into gbias).
    # NOTE: reference forward constructs nn.ReLU() but never applies it -> intentionally no ReLU.
    conv = jnp.zeros((SR, T), jnp.float32)
    for k in range(K):               # K=3, fully unrolled prologue (VPU)
        conv = conv + wconv[:, k:k + 1] * x[:, k:k + T]

    # ---- Hoisted input projection: ONE MXU matmul for every step/row, bias added once.
    gx = jnp.dot(conv, wih_t_ref[...], preferred_element_type=jnp.float32)   # (S*R, 4H)
    gx = gx + gbias_ref[...]         # per-row gate bias (bconv + b_ih + b_hh, permuted)

    whh_t = whh_t_ref[...]           # (H, 4H)   gate columns pre-permuted to (i, f, o, g)

    # ---- LSTM recurrence, fully unrolled; only h @ Whh^T remains inside the serial chain.
    h = jnp.zeros((R, H), jnp.float32)
    c = jnp.zeros((R, H), jnp.float32)
    hs = []
    for s in range(S):
        gates = gx[s * R:(s + 1) * R, :]          # aligned static 8k-row slice
        if s > 0:                                 # h == 0 at s == 0, skip the dead matmul
            gates = gates + jnp.dot(h, whh_t, preferred_element_type=jnp.float32)
        if_g = jax.nn.sigmoid(gates[:, :2 * H])   # i|f: the only EUP op on the c-critical path
        g_g = jnp.tanh(gates[:, 3 * H:])
        c = if_g[:, H:] * c + if_g[:, :H] * g_g
        o_g = jax.nn.sigmoid(gates[:, 2 * H:3 * H])   # off the c-path, overlaps tanh(c)
        h = o_g * jnp.tanh(c)
        hs.append(h)                              # keep in registers (no VMEM scratch)

    # ---- reg_1 and reg_2 fused: out[s, b] = sum_{r in block b, h} hs[s,r,h]*W12[r,h] + b12
    hstack = jnp.stack(hs, axis=0)                                   # (S, R, H)
    per = jnp.sum(hstack * w12_ref[...][None, :, :], axis=-1)        # (S, R)
    cols = [jnp.sum(per[:, b * CPL:(b + 1) * CPL], axis=-1, keepdims=True)
            for b in range(B)]
    out = cols[0] if B == 1 else jnp.concatenate(cols, axis=-1)      # (S, B)
    out_ref[...] = out + b12_ref[...]


def _pack_params(params, batch):
    """Pre-permute / pre-fold all weights for the kernel (rows = batch * CP)."""
    wconv, bconv, wih, whh, bih, bhh, w1, b1, w2, b2 = params
    H = whh.shape[1]
    C = wconv.shape[0]
    K = wconv.shape[2]

    # Permute PyTorch gate order (i, f, g, o) -> (i, f, o, g): one sigmoid covers the first
    # 2H lanes (i|f), o sits at [2H:3H], tanh covers the last H lanes (g).
    perm = jnp.concatenate([jnp.arange(0, 2 * H),        # i, f
                            jnp.arange(3 * H, 4 * H),    # o
                            jnp.arange(2 * H, 3 * H)])   # g
    wih_t = wih[perm].T.astype(jnp.float32)              # (T, 4H)  pre-transposed
    whh_t = whh[perm].T.astype(jnp.float32)              # (H, 4H)  pre-transposed
    bias_p = (bih + bhh)[perm].astype(jnp.float32)       # (4H,)

    # Conv weights per padded row (zero rows for the 2 pad channels).
    wconv2 = wconv[:, 0, :].astype(jnp.float32)                               # (C, K)
    wconv_pad = jnp.concatenate([wconv2, jnp.zeros((CP - C, K), jnp.float32)], axis=0)
    wconv_rows = jnp.tile(wconv_pad, (SEQ * batch, 1))                        # (S*R, K)

    # Per-row gate bias: bconv folded into the gate space, plus LSTM biases; 0 for pad rows.
    gbias_c = bconv[:, None].astype(jnp.float32) * jnp.sum(wih_t, axis=0)[None, :] \
        + bias_p[None, :]                                                     # (C, 4H)
    gbias_pad = jnp.concatenate([gbias_c, jnp.zeros((CP - C, 4 * H), jnp.float32)], axis=0)
    gbias_rows = jnp.tile(gbias_pad, (SEQ * batch, 1))                        # (S*R, 4H)

    # Fused reg_1/reg_2 weight: W12 = outer(w2, w1) per row; 0 for pad rows.
    w2_pad = jnp.concatenate([w2[0].astype(jnp.float32), jnp.zeros((CP - C,), jnp.float32)])
    w12_pad = w2_pad[:, None] * w1[0][None, :].astype(jnp.float32)            # (CP, H)
    w12_rows = jnp.tile(w12_pad, (batch, 1))                                  # (R, H)

    # Fold reg_1 / reg_2 biases: (r1 + b1) @ w2^T + b2 = r1 @ w2^T + (b1*sum(w2) + b2)
    b12 = (b1[0] * jnp.sum(w2) + b2[0]).reshape(1, 1).astype(jnp.float32)

    return wconv_rows, wih_t, whh_t, gbias_rows, w12_rows, b12


def _call_kernel(x_rows, packed, batch):
    wconv_rows, wih_t, whh_t, gbias_rows, w12_rows, b12 = packed
    args = (x_rows, wconv_rows, wih_t, whh_t, gbias_rows, w12_rows, b12)
    vmem = pl.BlockSpec(memory_space=pltpu.MemorySpace.VMEM)
    return pl.pallas_call(
        lstm_conv_kernel,
        out_shape=jax.ShapeDtypeStruct((SEQ, batch), jnp.float32),
        in_specs=[vmem] * len(args),
        out_specs=vmem,
    )(*args)


def lstm_conv_forward(x, params):
    """x: (S, 1, 7) float32 (PyTorch NCL). Returns (S, 1, 1). Matches LSTM_CONV.forward."""
    S = x.shape[0]
    L = x.shape[2]
    x2d = x[:, 0, :].astype(jnp.float32)                                   # (S, L)
    # Rows ordered (step, channel); channel rows are broadcast copies of the step's input.
    x_rows = jnp.broadcast_to(x2d[:, None, :], (S, CP, L)).reshape(S * CP, L)
    packed = _pack_params(params, batch=1)
    out = _call_kernel(x_rows, packed, batch=1)                            # (S, 1)
    return out.reshape(S, 1, 1)


def lstm_conv_forward_batched(xb, params):
    """xb: (B, S, 1, 7). Runs B independent sequences in ONE kernel call (rows = B*CP).
    Returns (B, S, 1, 1), equal to vmapping the single-sequence forward."""
    B, S = xb.shape[0], xb.shape[1]
    L = xb.shape[3]
    x2 = jnp.transpose(xb[:, :, 0, :].astype(jnp.float32), (1, 0, 2))      # (S, B, L)
    x_rows = jnp.broadcast_to(x2[:, :, None, :], (S, B, CP, L)).reshape(S * B * CP, L)
    packed = _pack_params(params, batch=B)
    out = _call_kernel(x_rows, packed, batch=B)                            # (S, B)
    return jnp.transpose(out, (1, 0)).reshape(B, S, 1, 1)


def reference_forward(x, params):
    """Pure-JAX reference matching the PyTorch forward."""
    wconv, bconv, wih, whh, bih, bhh, w1, b1, w2, b2 = params
    S = x.shape[0]
    H = whh.shape[1]
    xs = x[:, 0, :]
    patches = jnp.stack([xs[:, k:k + LSTM_IN] for k in range(KSIZE)], axis=-1)  # (S,5,3)
    y = jnp.einsum("stk,ck->sct", patches, wconv[:, 0, :]) + bconv[None, :, None]  # (S,6,5)

    def cell(carry, x_t):
        h, c = carry
        gates = x_t @ wih.T + h @ whh.T + bih + bhh
        i = jax.nn.sigmoid(gates[:, :H])
        f = jax.nn.sigmoid(gates[:, H:2 * H])
        g = jnp.tanh(gates[:, 2 * H:3 * H])
        o = jax.nn.sigmoid(gates[:, 3 * H:])
        c = f * c + i * g
        h = o * jnp.tanh(c)
        return (h, c), h

    h0 = jnp.zeros((CONV_OUT, H), jnp.float32)
    c0 = jnp.zeros((CONV_OUT, H), jnp.float32)
    _, hs = lax.scan(cell, (h0, c0), y)             # (S, 6, H)
    r1 = hs.reshape(S * CONV_OUT, H) @ w1.T + b1    # (S*6, 1)
    r1 = r1.reshape(S, CONV_OUT)
    out = r1 @ w2.T + b2                            # (S, 1)
    return out.reshape(S, 1, 1)


def init_params(key):
    ks = jax.random.split(key, 10)

    def uni(k, shape, bound):
        return jax.random.uniform(k, shape, jnp.float32, -bound, bound)

    bc = 1.0 / math.sqrt(1 * KSIZE)
    bl = 1.0 / math.sqrt(HIDDEN_SIZE)
    b2b = 1.0 / math.sqrt(CONV_OUT)
    wconv = uni(ks[0], (CONV_OUT, 1, KSIZE), bc)
    bconv = uni(ks[1], (CONV_OUT,), bc)
    wih = uni(ks[2], (4 * HIDDEN_SIZE, LSTM_IN), bl)
    whh = uni(ks[3], (4 * HIDDEN_SIZE, HIDDEN_SIZE), bl)
    bih = uni(ks[4], (4 * HIDDEN_SIZE,), bl)
    bhh = uni(ks[5], (4 * HIDDEN_SIZE,), bl)
    w1 = uni(ks[6], (1, HIDDEN_SIZE), bl)
    b1 = uni(ks[7], (1,), bl)
    w2 = uni(ks[8], (1, CONV_OUT), b2b)
    b2 = uni(ks[9], (1,), b2b)
    return (wconv, bconv, wih, whh, bih, bhh, w1, b1, w2, b2)


if __name__ == "__main__":
    root = jax.random.PRNGKey(0)
    pkey, xkey, bkey = jax.random.split(root, 3)
    params = init_params(pkey)

    # --- Module-faithful single-sequence forward: (S, 1, 7) -> (S, 1, 1)
    x = jax.random.normal(xkey, (SEQ, 1, INPUT_SIZE), jnp.float32)   # PyTorch NCL input
    out = jax.block_until_ready(lstm_conv_forward(x, params))
    assert out.shape == (SEQ, 1, 1), out.shape
    ref = jax.block_until_ready(reference_forward(x, params))
    assert jnp.allclose(out, ref, rtol=1e-3, atol=1e-3), (out.ravel(), ref.ravel())

    # --- Batched lever from the review: B independent sequences in one kernel invocation.
    B = 2
    xb = jax.random.normal(bkey, (B, SEQ, 1, INPUT_SIZE), jnp.float32)
    outb = jax.block_until_ready(lstm_conv_forward_batched(xb, params))
    refb = jax.block_until_ready(jax.vmap(lambda xi: reference_forward(xi, params))(xb))
    assert outb.shape == (B, SEQ, 1, 1), outb.shape
    assert jnp.allclose(outb, refb, rtol=1e-3, atol=1e-3), (outb.ravel(), refb.ravel())

    print("KERNEL_OK")
</pallas_src>

<mosaic_0001>
module attributes {stable_mosaic.version = 11 : i64} {
  func.func @lstm_conv_kernel(%arg0: memref<64x7xf32, #tpu.memory_space<vmem>>, %arg1: memref<64x3xf32, #tpu.memory_space<vmem>>, %arg2: memref<5x192xf32, #tpu.memory_space<vmem>>, %arg3: memref<48x192xf32, #tpu.memory_space<vmem>>, %arg4: memref<64x192xf32, #tpu.memory_space<vmem>>, %arg5: memref<8x48xf32, #tpu.memory_space<vmem>>, %arg6: memref<1x1xf32, #tpu.memory_space<vmem>>, %arg7: memref<8x1xf32, #tpu.memory_space<vmem>>) attributes {dimension_semantics = [], scalar_prefetch = 0 : i64, scratch_operands = 0 : i64, tpu.core_type = #tpu.core_type<tc>} {
    %c0 = arith.constant 0 : index
    %c0_0 = arith.constant 0 : index
    %0 = vector.load %arg0[%c0, %c0_0] : memref<64x7xf32, #tpu.memory_space<vmem>>, vector<64x7xf32>
    %c0_1 = arith.constant 0 : index
    %c0_2 = arith.constant 0 : index
    %1 = vector.load %arg1[%c0_1, %c0_2] : memref<64x3xf32, #tpu.memory_space<vmem>>, vector<64x3xf32>
    %cst = arith.constant 0.000000e+00 : f32
    %2 = vector.broadcast %cst : f32 to vector<64x5xf32>
    %3 = vector.extract_strided_slice %1 {offsets = [0, 0], sizes = [64, 1], strides = [1, 1]} : vector<64x3xf32> to vector<64x1xf32>
    %4 = vector.extract_strided_slice %0 {offsets = [0, 0], sizes = [64, 5], strides = [1, 1]} : vector<64x7xf32> to vector<64x5xf32>
    %5 = vector.broadcast %3 : vector<64x1xf32> to vector<64x5xf32>
    %6 = arith.mulf %5, %4 : vector<64x5xf32>
    %7 = arith.addf %2, %6 : vector<64x5xf32>
    %8 = vector.extract_strided_slice %1 {offsets = [0, 1], sizes = [64, 1], strides = [1, 1]} : vector<64x3xf32> to vector<64x1xf32>
    %9 = vector.extract_strided_slice %0 {offsets = [0, 1], sizes = [64, 5], strides = [1, 1]} : vector<64x7xf32> to vector<64x5xf32>
    %10 = vector.broadcast %8 : vector<64x1xf32> to vector<64x5xf32>
    %11 = arith.mulf %10, %9 : vector<64x5xf32>
    %12 = arith.addf %7, %11 : vector<64x5xf32>
    %13 = vector.extract_strided_slice %1 {offsets = [0, 2], sizes = [64, 1], strides = [1, 1]} : vector<64x3xf32> to vector<64x1xf32>
    %14 = vector.extract_strided_slice %0 {offsets = [0, 2], sizes = [64, 5], strides = [1, 1]} : vector<64x7xf32> to vector<64x5xf32>
    %15 = vector.broadcast %13 : vector<64x1xf32> to vector<64x5xf32>
    %16 = arith.mulf %15, %14 : vector<64x5xf32>
    %17 = arith.addf %12, %16 : vector<64x5xf32>
    %c0_3 = arith.constant 0 : index
    %c0_4 = arith.constant 0 : index
    %18 = vector.load %arg2[%c0_3, %c0_4] : memref<5x192xf32, #tpu.memory_space<vmem>>, vector<5x192xf32>
    %cst_5 = arith.constant dense<0.000000e+00> : vector<64x192xf32>
    %19 = tpu.matmul %17, %18, %cst_5 {dimension_numbers = #tpu.dot_dimension_numbers<[1], [0], [0], [1], [0, 0, 1, 1], [], []>} : vector<64x5xf32>, vector<5x192xf32>, vector<64x192xf32> -> vector<64x192xf32>
    %c0_6 = arith.constant 0 : index
    %c0_7 = arith.constant 0 : index
    %20 = vector.load %arg4[%c0_6, %c0_7] : memref<64x192xf32, #tpu.memory_space<vmem>>, vector<64x192xf32>
    %21 = arith.addf %19, %20 : vector<64x192xf32>
    %c0_8 = arith.constant 0 : index
    %c0_9 = arith.constant 0 : index
    %22 = vector.load %arg3[%c0_8, %c0_9] : memref<48x192xf32, #tpu.memory_space<vmem>>, vector<48x192xf32>
    %cst_10 = arith.constant 0.000000e+00 : f32
    %23 = vector.broadcast %cst_10 : f32 to vector<8x48xf32>
    %24 = vector.extract_strided_slice %21 {offsets = [0, 0], sizes = [8, 192], strides = [1, 1]} : vector<64x192xf32> to vector<8x192xf32>
    %25 = vector.extract_strided_slice %24 {offsets = [0, 0], sizes = [8, 96], strides = [1, 1]} : vector<8x192xf32> to vector<8x96xf32>
    %26 = arith.negf %25 : vector<8x96xf32>
    %27 = math.exp %26 : vector<8x96xf32>
    %cst_11 = arith.constant 1.000000e+00 : f32
    %28 = vector.broadcast %cst_11 : f32 to vector<8x96xf32>
    %29 = arith.addf %28, %27 : vector<8x96xf32>
    %30 = arith.divf %28, %29 : vector<8x96xf32>
    %31 = vector.extract_strided_slice %24 {offsets = [0, 144], sizes = [8, 48], strides = [1, 1]} : vector<8x192xf32> to vector<8x48xf32>
    %32 = math.tanh %31 : vector<8x48xf32>
    %33 = vector.extract_strided_slice %30 {offsets = [0, 48], sizes = [8, 48], strides = [1, 1]} : vector<8x96xf32> to vector<8x48xf32>
    %34 = arith.mulf %33, %23 : vector<8x48xf32>
    %35 = vector.extract_strided_slice %30 {offsets = [0, 0], sizes = [8, 48], strides = [1, 1]} : vector<8x96xf32> to vector<8x48xf32>
    %36 = arith.mulf %35, %32 : vector<8x48xf32>
    %37 = arith.addf %34, %36 : vector<8x48xf32>
    %38 = vector.extract_strided_slice %24 {offsets = [0, 96], sizes = [8, 48], strides = [1, 1]} : vector<8x192xf32> to vector<8x48xf32>
    %39 = arith.negf %38 : vector<8x48xf32>
    %40 = math.exp %39 : vector<8x48xf32>
    %cst_12 = arith.constant 1.000000e+00 : f32
    %41 = vector.broadcast %cst_12 : f32 to vector<8x48xf32>
    %42 = arith.addf %41, %40 : vector<8x48xf32>
    %43 = arith.divf %41, %42 : vector<8x48xf32>
    %44 = math.tanh %37 : vector<8x48xf32>
    %45 = arith.mulf %43, %44 : vector<8x48xf32>
    %46 = vector.extract_strided_slice %21 {offsets = [8, 0], sizes = [8, 192], strides = [1, 1]} : vector<64x192xf32> to vector<8x192xf32>
    %cst_13 = arith.constant dense<0.000000e+00> : vector<8x192xf32>
    %47 = tpu.matmul %45, %22, %cst_13 {dimension_numbers = #tpu.dot_dimension_numbers<[1], [0], [0], [1], [0, 0, 1, 1], [], []>} : vector<8x48xf32>, vector<48x192xf32>, vector<8x192xf32> -> vector<8x192xf32>
    %48 = arith.addf %46, %47 : vector<8x192xf32>
    %49 = vector.extract_strided_slice %48 {offsets = [0, 0], sizes = [8, 96], strides = [1, 1]} : vector<8x192xf32> to vector<8x96xf32>
    %50 = arith.negf %49 : vector<8x96xf32>
    %51 = math.exp %50 : vector<8x96xf32>
    %cst_14 = arith.constant 1.000000e+00 : f32
    %52 = vector.broadcast %cst_14 : f32 to vector<8x96xf32>
    %53 = arith.addf %52, %51 : vector<8x96xf32>
    %54 = arith.divf %52, %53 : vector<8x96xf32>
    %55 = vector.extract_strided_slice %48 {offsets = [0, 144], sizes = [8, 48], strides = [1, 1]} : vector<8x192xf32> to vector<8x48xf32>
    %56 = math.tanh %55 : vector<8x48xf32>
    %57 = vector.extract_strided_slice %54 {offsets = [0, 48], sizes = [8, 48], strides = [1, 1]} : vector<8x96xf32> to vector<8x48xf32>
    %58 = arith.mulf %57, %37 : vector<8x48xf32>
    %59 = vector.extract_strided_slice %54 {offsets = [0, 0], sizes = [8, 48], strides = [1, 1]} : vector<8x96xf32> to vector<8x48xf32>
    %60 = arith.mulf %59, %56 : vector<8x48xf32>
    %61 = arith.addf %58, %60 : vector<8x48xf32>
    %62 = vector.extract_strided_slice %48 {offsets = [0, 96], sizes = [8, 48], strides = [1, 1]} : vector<8x192xf32> to vector<8x48xf32>
    %63 = arith.negf %62 : vector<8x48xf32>
    %64 = math.exp %63 : vector<8x48xf32>
    %cst_15 = arith.constant 1.000000e+00 : f32
    %65 = vector.broadcast %cst_15 : f32 to vector<8x48xf32>
    %66 = arith.addf %65, %64 : vector<8x48xf32>
    %67 = arith.divf %65, %66 : vector<8x48xf32>
    %68 = math.tanh %61 : vector<8x48xf32>
    %69 = arith.mulf %67, %68 : vector<8x48xf32>
    %70 = vector.extract_strided_slice %21 {offsets = [16, 0], sizes = [8, 192], strides = [1, 1]} : vector<64x192xf32> to vector<8x192xf32>
    %cst_16 = arith.constant dense<0.000000e+00> : vector<8x192xf32>
    %71 = tpu.matmul %69, %22, %cst_16 {dimension_numbers = #tpu.dot_dimension_numbers<[1], [0], [0], [1], [0, 0, 1, 1], [], []>} : vector<8x48xf32>, vector<48x192xf32>, vector<8x192xf32> -> vector<8x192xf32>
    %72 = arith.addf %70, %71 : vector<8x192xf32>
    %73 = vector.extract_strided_slice %72 {offsets = [0, 0], sizes = [8, 96], strides = [1, 1]} : vector<8x192xf32> to vector<8x96xf32>
    %74 = arith.negf %73 : vector<8x96xf32>
    %75 = math.exp %74 : vector<8x96xf32>
    %cst_17 = arith.constant 1.000000e+00 : f32
    %76 = vector.broadcast %cst_17 : f32 to vector<8x96xf32>
    %77 = arith.addf %76, %75 : vector<8x96xf32>
    %78 = arith.divf %76, %77 : vector<8x96xf32>
    %79 = vector.extract_strided_slice %72 {offsets = [0, 144], sizes = [8, 48], strides = [1, 1]} : vector<8x192xf32> to vector<8x48xf32>
    %80 = math.tanh %79 : vector<8x48xf32>
    %81 = vector.extract_strided_slice %78 {offsets = [0, 48], sizes = [8, 48], strides = [1, 1]} : vector<8x96xf32> to vector<8x48xf32>
    %82 = arith.mulf %81, %61 : vector<8x48xf32>
    %83 = vector.extract_strided_slice %78 {offsets = [0, 0], sizes = [8, 48], strides = [1, 1]} : vector<8x96xf32> to vector<8x48xf32>
    %84 = arith.mulf %83, %80 : vector<8x48xf32>
    %85 = arith.addf %82, %84 : vector<8x48xf32>
    %86 = vector.extract_strided_slice %72 {offsets = [0, 96], sizes = [8, 48], strides = [1, 1]} : vector<8x192xf32> to vector<8x48xf32>
    %87 = arith.negf %86 : vector<8x48xf32>
    %88 = math.exp %87 : vector<8x48xf32>
    %cst_18 = arith.constant 1.000000e+00 : f32
    %89 = vector.broadcast %cst_18 : f32 to vector<8x48xf32>
    %90 = arith.addf %89, %88 : vector<8x48xf32>
    %91 = arith.divf %89, %90 : vector<8x48xf32>
    %92 = math.tanh %85 : vector<8x48xf32>
    %93 = arith.mulf %91, %92 : vector<8x48xf32>
    %94 = vector.extract_strided_slice %21 {offsets = [24, 0], sizes = [8, 192], strides = [1, 1]} : vector<64x192xf32> to vector<8x192xf32>
    %cst_19 = arith.constant dense<0.000000e+00> : vector<8x192xf32>
    %95 = tpu.matmul %93, %22, %cst_19 {dimension_numbers = #tpu.dot_dimension_numbers<[1], [0], [0], [1], [0, 0, 1, 1], [], []>} : vector<8x48xf32>, vector<48x192xf32>, vector<8x192xf32> -> vector<8x192xf32>
    %96 = arith.addf %94, %95 : vector<8x192xf32>
    %97 = vector.extract_strided_slice %96 {offsets = [0, 0], sizes = [8, 96], strides = [1, 1]} : vector<8x192xf32> to vector<8x96xf32>
    %98 = arith.negf %97 : vector<8x96xf32>
    %99 = math.exp %98 : vector<8x96xf32>
    %cst_20 = arith.constant 1.000000e+00 : f32
    %100 = vector.broadcast %cst_20 : f32 to vector<8x96xf32>
    %101 = arith.addf %100, %99 : vector<8x96xf32>
    %102 = arith.divf %100, %101 : vector<8x96xf32>
    %103 = vector.extract_strided_slice %96 {offsets = [0, 144], sizes = [8, 48], strides = [1, 1]} : vector<8x192xf32> to vector<8x48xf32>
    %104 = math.tanh %103 : vector<8x48xf32>
    %105 = vector.extract_strided_slice %102 {offsets = [0, 48], sizes = [8, 48], strides = [1, 1]} : vector<8x96xf32> to vector<8x48xf32>
    %106 = arith.mulf %105, %85 : vector<8x48xf32>
    %107 = vector.extract_strided_slice %102 {offsets = [0, 0], sizes = [8, 48], strides = [1, 1]} : vector<8x96xf32> to vector<8x48xf32>
    %108 = arith.mulf %107, %104 : vector<8x48xf32>
    %109 = arith.addf %106, %108 : vector<8x48xf32>
    %110 = vector.extract_strided_slice %96 {offsets = [0, 96], sizes = [8, 48], strides = [1, 1]} : vector<8x192xf32> to vector<8x48xf32>
    %111 = arith.negf %110 : vector<8x48xf32>
    %112 = math.exp %111 : vector<8x48xf32>
    %cst_21 = arith.constant 1.000000e+00 : f32
    %113 = vector.broadcast %cst_21 : f32 to vector<8x48xf32>
    %114 = arith.addf %113, %112 : vector<8x48xf32>
    %115 = arith.divf %113, %114 : vector<8x48xf32>
    %116 = math.tanh %109 : vector<8x48xf32>
    %117 = arith.mulf %115, %116 : vector<8x48xf32>
    %118 = vector.extract_strided_slice %21 {offsets = [32, 0], sizes = [8, 192], strides = [1, 1]} : vector<64x192xf32> to vector<8x192xf32>
    %cst_22 = arith.constant dense<0.000000e+00> : vector<8x192xf32>
    %119 = tpu.matmul %117, %22, %cst_22 {dimension_numbers = #tpu.dot_dimension_numbers<[1], [0], [0], [1], [0, 0, 1, 1], [], []>} : vector<8x48xf32>, vector<48x192xf32>, vector<8x192xf32> -> vector<8x192xf32>
    %120 = arith.addf %118, %119 : vector<8x192xf32>
    %121 = vector.extract_strided_slice %120 {offsets = [0, 0], sizes = [8, 96], strides = [1, 1]} : vector<8x192xf32> to vector<8x96xf32>
    %122 = arith.negf %121 : vector<8x96xf32>
    %123 = math.exp %122 : vector<8x96xf32>
    %cst_23 = arith.constant 1.000000e+00 : f32
    %124 = vector.broadcast %cst_23 : f32 to vector<8x96xf32>
    %125 = arith.addf %124, %123 : vector<8x96xf32>
    %126 = arith.divf %124, %125 : vector<8x96xf32>
    %127 = vector.extract_strided_slice %120 {offsets = [0, 144], sizes = [8, 48], strides = [1, 1]} : vector<8x192xf32> to vector<8x48xf32>
    %128 = math.tanh %127 : vector<8x48xf32>
    %129 = vector.extract_strided_slice %126 {offsets = [0, 48], sizes = [8, 48], strides = [1, 1]} : vector<8x96xf32> to vector<8x48xf32>
    %130 = arith.mulf %129, %109 : vector<8x48xf32>
    %131 = vector.extract_strided_slice %126 {offsets = [0, 0], sizes = [8, 48], strides = [1, 1]} : vector<8x96xf32> to vector<8x48xf32>
    %132 = arith.mulf %131, %128 : vector<8x48xf32>
    %133 = arith.addf %130, %132 : vector<8x48xf32>
    %134 = vector.extract_strided_slice %120 {offsets = [0, 96], sizes = [8, 48], strides = [1, 1]} : vector<8x192xf32> to vector<8x48xf32>
    %135 = arith.negf %134 : vector<8x48xf32>
    %136 = math.exp %135 : vector<8x48xf32>
    %cst_24 = arith.constant 1.000000e+00 : f32
    %137 = vector.broadcast %cst_24 : f32 to vector<8x48xf32>
    %138 = arith.addf %137, %136 : vector<8x48xf32>
    %139 = arith.divf %137, %138 : vector<8x48xf32>
    %140 = math.tanh %133 : vector<8x48xf32>
    %141 = arith.mulf %139, %140 : vector<8x48xf32>
    %142 = vector.extract_strided_slice %21 {offsets = [40, 0], sizes = [8, 192], strides = [1, 1]} : vector<64x192xf32> to vector<8x192xf32>
    %cst_25 = arith.constant dense<0.000000e+00> : vector<8x192xf32>
    %143 = tpu.matmul %141, %22, %cst_25 {dimension_numbers = #tpu.dot_dimension_numbers<[1], [0], [0], [1], [0, 0, 1, 1], [], []>} : vector<8x48xf32>, vector<48x192xf32>, vector<8x192xf32> -> vector<8x192xf32>
    %144 = arith.addf %142, %143 : vector<8x192xf32>
    %145 = vector.extract_strided_slice %144 {offsets = [0, 0], sizes = [8, 96], strides = [1, 1]} : vector<8x192xf32> to vector<8x96xf32>
    %146 = arith.negf %145 : vector<8x96xf32>
    %147 = math.exp %146 : vector<8x96xf32>
    %cst_26 = arith.constant 1.000000e+00 : f32
    %148 = vector.broadcast %cst_26 : f32 to vector<8x96xf32>
    %149 = arith.addf %148, %147 : vector<8x96xf32>
    %150 = arith.divf %148, %149 : vector<8x96xf32>
    %151 = vector.extract_strided_slice %144 {offsets = [0, 144], sizes = [8, 48], strides = [1, 1]} : vector<8x192xf32> to vector<8x48xf32>
    %152 = math.tanh %151 : vector<8x48xf32>
    %153 = vector.extract_strided_slice %150 {offsets = [0, 48], sizes = [8, 48], strides = [1, 1]} : vector<8x96xf32> to vector<8x48xf32>
    %154 = arith.mulf %153, %133 : vector<8x48xf32>
    %155 = vector.extract_strided_slice %150 {offsets = [0, 0], sizes = [8, 48], strides = [1, 1]} : vector<8x96xf32> to vector<8x48xf32>
    %156 = arith.mulf %155, %152 : vector<8x48xf32>
    %157 = arith.addf %154, %156 : vector<8x48xf32>
    %158 = vector.extract_strided_slice %144 {offsets = [0, 96], sizes = [8, 48], strides = [1, 1]} : vector<8x192xf32> to vector<8x48xf32>
    %159 = arith.negf %158 : vector<8x48xf32>
    %160 = math.exp %159 : vector<8x48xf32>
    %cst_27 = arith.constant 1.000000e+00 : f32
    %161 = vector.broadcast %cst_27 : f32 to vector<8x48xf32>
    %162 = arith.addf %161, %160 : vector<8x48xf32>
    %163 = arith.divf %161, %162 : vector<8x48xf32>
    %164 = math.tanh %157 : vector<8x48xf32>
    %165 = arith.mulf %163, %164 : vector<8x48xf32>
    %166 = vector.extract_strided_slice %21 {offsets = [48, 0], sizes = [8, 192], strides = [1, 1]} : vector<64x192xf32> to vector<8x192xf32>
    %cst_28 = arith.constant dense<0.000000e+00> : vector<8x192xf32>
    %167 = tpu.matmul %165, %22, %cst_28 {dimension_numbers = #tpu.dot_dimension_numbers<[1], [0], [0], [1], [0, 0, 1, 1], [], []>} : vector<8x48xf32>, vector<48x192xf32>, vector<8x192xf32> -> vector<8x192xf32>
    %168 = arith.addf %166, %167 : vector<8x192xf32>
    %169 = vector.extract_strided_slice %168 {offsets = [0, 0], sizes = [8, 96], strides = [1, 1]} : vector<8x192xf32> to vector<8x96xf32>
    %170 = arith.negf %169 : vector<8x96xf32>
    %171 = math.exp %170 : vector<8x96xf32>
    %cst_29 = arith.constant 1.000000e+00 : f32
    %172 = vector.broadcast %cst_29 : f32 to vector<8x96xf32>
    %173 = arith.addf %172, %171 : vector<8x96xf32>
    %174 = arith.divf %172, %173 : vector<8x96xf32>
    %175 = vector.extract_strided_slice %168 {offsets = [0, 144], sizes = [8, 48], strides = [1, 1]} : vector<8x192xf32> to vector<8x48xf32>
    %176 = math.tanh %175 : vector<8x48xf32>
    %177 = vector.extract_strided_slice %174 {offsets = [0, 48], sizes = [8, 48], strides = [1, 1]} : vector<8x96xf32> to vector<8x48xf32>
    %178 = arith.mulf %177, %157 : vector<8x48xf32>
    %179 = vector.extract_strided_slice %174 {offsets = [0, 0], sizes = [8, 48], strides = [1, 1]} : vector<8x96xf32> to vector<8x48xf32>
    %180 = arith.mulf %179, %176 : vector<8x48xf32>
    %181 = arith.addf %178, %180 : vector<8x48xf32>
    %182 = vector.extract_strided_slice %168 {offsets = [0, 96], sizes = [8, 48], strides = [1, 1]} : vector<8x192xf32> to vector<8x48xf32>
    %183 = arith.negf %182 : vector<8x48xf32>
    %184 = math.exp %183 : vector<8x48xf32>
    %cst_30 = arith.constant 1.000000e+00 : f32
    %185 = vector.broadcast %cst_30 : f32 to vector<8x48xf32>
    %186 = arith.addf %185, %184 : vector<8x48xf32>
    %187 = arith.divf %185, %186 : vector<8x48xf32>
    %188 = math.tanh %181 : vector<8x48xf32>
    %189 = arith.mulf %187, %188 : vector<8x48xf32>
    %190 = vector.extract_strided_slice %21 {offsets = [56, 0], sizes = [8, 192], strides = [1, 1]} : vector<64x192xf32> to vector<8x192xf32>
    %cst_31 = arith.constant dense<0.000000e+00> : vector<8x192xf32>
    %191 = tpu.matmul %189, %22, %cst_31 {dimension_numbers = #tpu.dot_dimension_numbers<[1], [0], [0], [1], [0, 0, 1, 1], [], []>} : vector<8x48xf32>, vector<48x192xf32>, vector<8x192xf32> -> vector<8x192xf32>
    %192 = arith.addf %190, %191 : vector<8x192xf32>
    %193 = vector.extract_strided_slice %192 {offsets = [0, 0], sizes = [8, 96], strides = [1, 1]} : vector<8x192xf32> to vector<8x96xf32>
    %194 = arith.negf %193 : vector<8x96xf32>
    %195 = math.exp %194 : vector<8x96xf32>
    %cst_32 = arith.constant 1.000000e+00 : f32
    %196 = vector.broadcast %cst_32 : f32 to vector<8x96xf32>
    %197 = arith.addf %196, %195 : vector<8x96xf32>
    %198 = arith.divf %196, %197 : vector<8x96xf32>
    %199 = vector.extract_strided_slice %192 {offsets = [0, 144], sizes = [8, 48], strides = [1, 1]} : vector<8x192xf32> to vector<8x48xf32>
    %200 = math.tanh %199 : vector<8x48xf32>
    %201 = vector.extract_strided_slice %198 {offsets = [0, 48], sizes = [8, 48], strides = [1, 1]} : vector<8x96xf32> to vector<8x48xf32>
    %202 = arith.mulf %201, %181 : vector<8x48xf32>
    %203 = vector.extract_strided_slice %198 {offsets = [0, 0], sizes = [8, 48], strides = [1, 1]} : vector<8x96xf32> to vector<8x48xf32>
    %204 = arith.mulf %203, %200 : vector<8x48xf32>
    %205 = arith.addf %202, %204 : vector<8x48xf32>
    %206 = vector.extract_strided_slice %192 {offsets = [0, 96], sizes = [8, 48], strides = [1, 1]} : vector<8x192xf32> to vector<8x48xf32>
    %207 = arith.negf %206 : vector<8x48xf32>
    %208 = math.exp %207 : vector<8x48xf32>
    %cst_33 = arith.constant 1.000000e+00 : f32
    %209 = vector.broadcast %cst_33 : f32 to vector<8x48xf32>
    %210 = arith.addf %209, %208 : vector<8x48xf32>
    %211 = arith.divf %209, %210 : vector<8x48xf32>
    %212 = math.tanh %205 : vector<8x48xf32>
    %213 = arith.mulf %211, %212 : vector<8x48xf32>
    %214 = vector.shape_cast %45 : vector<8x48xf32> to vector<1x8x48xf32>
    %215 = vector.shape_cast %69 : vector<8x48xf32> to vector<1x8x48xf32>
    %216 = vector.shape_cast %93 : vector<8x48xf32> to vector<1x8x48xf32>
    %217 = vector.shape_cast %117 : vector<8x48xf32> to vector<1x8x48xf32>
    %218 = vector.shape_cast %141 : vector<8x48xf32> to vector<1x8x48xf32>
    %219 = vector.shape_cast %165 : vector<8x48xf32> to vector<1x8x48xf32>
    %220 = vector.shape_cast %189 : vector<8x48xf32> to vector<1x8x48xf32>
    %221 = vector.shape_cast %213 : vector<8x48xf32> to vector<1x8x48xf32>
    %222 = tpu.concatenate %214, %215, %216, %217, %218, %219, %220, %221 in 0 : vector<1x8x48xf32>, vector<1x8x48xf32>, vector<1x8x48xf32>, vector<1x8x48xf32>, vector<1x8x48xf32>, vector<1x8x48xf32>, vector<1x8x48xf32>, vector<1x8x48xf32> -> vector<8x8x48xf32>
    %c0_34 = arith.constant 0 : index
    %c0_35 = arith.constant 0 : index
    %223 = vector.load %arg5[%c0_34, %c0_35] : memref<8x48xf32, #tpu.memory_space<vmem>>, vector<8x48xf32>
    %224 = vector.shape_cast %223 : vector<8x48xf32> to vector<1x8x48xf32>
    %225 = vector.broadcast %224 : vector<1x8x48xf32> to vector<8x8x48xf32>
    %226 = arith.mulf %222, %225 : vector<8x8x48xf32>
    %cst_36 = arith.constant dense<0.000000e+00> : vector<8x8xf32>
    %227 = vector.multi_reduction <add>, %226, %cst_36 [2] : vector<8x8x48xf32> to vector<8x8xf32>
    %cst_37 = arith.constant dense<0.000000e+00> : vector<8xf32>
    %228 = vector.multi_reduction <add>, %227, %cst_37 [1] : vector<8x8xf32> to vector<8xf32>
    %229 = vector.shape_cast %228 : vector<8xf32> to vector<8x1xf32>
    %c0_38 = arith.constant 0 : index
    %c0_39 = arith.constant 0 : index
    %230 = vector.load %arg6[%c0_38, %c0_39] : memref<1x1xf32, #tpu.memory_space<vmem>>, vector<1x1xf32>
    %231 = vector.broadcast %230 : vector<1x1xf32> to vector<8x1xf32>
    %232 = arith.addf %229, %231 : vector<8x1xf32>
    %c0_40 = arith.constant 0 : index
    %c0_41 = arith.constant 0 : index
    %233 = vector.load %arg7[%c0_40, %c0_41] : memref<8x1xf32, #tpu.memory_space<vmem>>, vector<8x1xf32>
    tpu.vector_store %arg7[%c0_40, %c0_41], %232 {strides = array<i32>} : memref<8x1xf32, #tpu.memory_space<vmem>>, vector<8x1xf32>,
    return
  }
}

</mosaic_0001>

<llo_original>
// kernel: tpu_custom_call.1
$region0: #{tpu_custom_call.1}
  #allocation0 [shape = 'u32[]', space=smem, size = 0x4, offset = 0x4, fixed_abs, tag = 'smem constant byte address 0x4 - core index']
  #allocation1 [shape = 'u32[72,128]{1,0:T(1,128)}', space=vmem, size = 0x9000, scoped, tag = 'internal scratch']
  #allocation2 [shape = 'f32[1,1]{1,0:T(1,128)S(1)}', space=vmem, size = 0x200, scoped, tag = 'scoped memory for tpu_custom_call.1']
  %s0 = inlined_call_operand.vmem [shape: f32[64,7], index: 0, kind: input, shape index: {}]
  %s1 = inlined_call_operand.vmem [shape: f32[64,3], index: 1, kind: input, shape index: {}]
  %s2 = inlined_call_operand.hbm [shape: f32[5,192], index: 2, kind: input, shape index: {}]
  %s3 = inlined_call_operand.hbm [shape: f32[48,192], index: 3, kind: input, shape index: {}]
  %s4 = inlined_call_operand.vmem [shape: f32[64,192], index: 4, kind: input, shape index: {}]
  %s5 = inlined_call_operand.vmem [shape: f32[8,48], index: 5, kind: input, shape index: {}]
  %s6 = inlined_call_operand.<no memory space> [shape: f32[1,1], index: 6, kind: input, shape index: {}]
  %s7 = inlined_call_operand.vmem [shape: f32[8,1], index: 7, kind: output, shape index: {}]
  %s8 = sld [smem:[#allocation0]]
  $region46: #{tpu_custom_call.1} parent=0
    _
  %s10 = ssub.s32 1, %s8
  %s11 = scalar_select 0, %s10, %s8
  %v12 = vstv %s6
  %13 = vst [vmem:[#allocation2] sm:$0x1] %v12
  $region1: #{tpu_custom_call.1} parent=0
    #allocation3 [shape = 'u8[8192]{0}', space=vmem, size = 0x2000, scoped, tag = 'input window, operand 2, single buffered']
    #allocation4 [shape = 's32[1]{0}', space=sflag, size = 0x4, scoped, tag = 'scoped memory for tpu_custom_call.1']
    #allocation5 [shape = 'u8[49152]{0}', space=vmem, size = 0xc000, scoped, tag = 'input window, operand 3, single buffered']
    #allocation6 [shape = 's32[1]{0}', space=sflag, size = 0x4, scoped, tag = 'scoped memory for tpu_custom_call.1']
    %14 = vsyncpa [#allocation4], 0
    %15 = vsyncpa [#allocation6], 0
    // Predicated region
    $region2: #{tpu_custom_call.1} parent=1 // pred_check
      _
    $region3: #{tpu_custom_call.1} parent=1 // pred_check_branch
      %17 = sbr.rel (0) target = $region5
    $region4: #{tpu_custom_call.1} parent=1 // pred_region
      _
    $region5: #{tpu_custom_call.1} parent=1 // pred_fallthru
      _
    // Predicated region
    $region6: #{tpu_custom_call.1} parent=1 // pred_check
      _
    $region7: #{tpu_custom_call.1} parent=1 // pred_check_branch
      %19 = sbr.rel (0) target = $region9
    $region8: #{tpu_custom_call.1} parent=1 // pred_region
      _
    $region9: #{tpu_custom_call.1} parent=1 // pred_fallthru
      _
    // Predicated region
    $region10: #{tpu_custom_call.1} parent=1 // pred_check
      _
    $region11: #{tpu_custom_call.1} parent=1 // pred_check_branch
      %21 = sbr.rel (0) target = $region13
    $region12: #{tpu_custom_call.1} parent=1 // pred_region
      %23 = vsyncadd [#allocation4], 0
      %s25 = sshll.u32 %s2, 4
      %s26 = int_to_ptr.hbm [resolvable:$true] %s25
      %s27 = sshll.u32 [#allocation3], 4
      %s28 = int_to_ptr.vmem [resolvable:$true] %s27
      %30 = dma.hbm_to_vmem [thread:$0]  %s26, 256, %s28, [#allocation4]
    $region13: #{tpu_custom_call.1} parent=1 // pred_fallthru
      _
    // Predicated region
    $region14: #{tpu_custom_call.1} parent=1 // pred_check
      _
    $region15: #{tpu_custom_call.1} parent=1 // pred_check_branch
      %32 = sbr.rel (0) target = $region17
    $region16: #{tpu_custom_call.1} parent=1 // pred_region
      %34 = vsyncadd [#allocation6], 0
      %s35 = sshll.u32 %s3, 4
      %s36 = int_to_ptr.hbm [resolvable:$true] %s35
      %s37 = sshll.u32 [#allocation5], 4
      %s38 = int_to_ptr.vmem [resolvable:$true] %s37
      %43 = dma.hbm_to_vmem [thread:$0]  %s36, 1536, %s38, [#allocation6], 256, 256, 16
    $region17: #{tpu_custom_call.1} parent=1 // pred_fallthru
      _
    // Predicated region
    $region18: #{tpu_custom_call.1} parent=1 // pred_check
      _
    $region19: #{tpu_custom_call.1} parent=1 // pred_check_branch
      %45 = sbr.rel (0) target = $region21
    $region20: #{tpu_custom_call.1} parent=1 // pred_region
      _
    $region21: #{tpu_custom_call.1} parent=1 // pred_fallthru
      _
    // Predicated region
    $region22: #{tpu_custom_call.1} parent=1 // pred_check
      _
    $region23: #{tpu_custom_call.1} parent=1 // pred_check_branch
      %47 = sbr.rel (0) target = $region25
    $region24: #{tpu_custom_call.1} parent=1 // pred_region
      _
    $region25: #{tpu_custom_call.1} parent=1 // pred_fallthru
      _
    // Predicated region
    $region26: #{tpu_custom_call.1} parent=1 // pred_check
      _
    $region27: #{tpu_custom_call.1} parent=1 // pred_check_branch
      %49 = sbr.rel (0) target = $region29
    $region28: #{tpu_custom_call.1} parent=1 // pred_region
      _
    $region29: #{tpu_custom_call.1} parent=1 // pred_fallthru
      _
    // Predicated region
    $region30: #{tpu_custom_call.1} parent=1 // pred_check
      _
    $region31: #{tpu_custom_call.1} parent=1 // pred_check_branch
      %51 = sbr.rel (0) target = $region33
    $region32: #{tpu_custom_call.1} parent=1 // pred_region
      %53 = dma.done [#allocation4], 256
    $region33: #{tpu_custom_call.1} parent=1 // pred_fallthru
      _
    // Predicated region
    $region34: #{tpu_custom_call.1} parent=1 // pred_check
      _
    $region35: #{tpu_custom_call.1} parent=1 // pred_check_branch
      %55 = sbr.rel (0) target = $region37
    $region36: #{tpu_custom_call.1} parent=1 // pred_region
      %57 = dma.done [#allocation6], 1536
    $region37: #{tpu_custom_call.1} parent=1 // pred_fallthru
      _
    %v58 = vld [vmem:[%s0] sm:$0xff]
    %v59 = vld [vmem:[%s0 + $0x8] sm:$0xff]
    %v60 = vld [vmem:[%s0 + $0x10] sm:$0xff]
    %v61 = vld [vmem:[%s0 + $0x18] sm:$0xff]
    %v62 = vld [vmem:[%s0 + $0x20] sm:$0xff]
    %v63 = vld [vmem:[%s0 + $0x28] sm:$0xff]
    %v64 = vld [vmem:[%s0 + $0x30] sm:$0xff]
    %v65 = vld [vmem:[%s0 + $0x38] sm:$0xff]
    %v66 = vld [vmem:[%s1] sm:$0xff]
    %v67 = vld [vmem:[%s1 + $0x8] sm:$0xff]
    %v68 = vld [vmem:[%s1 + $0x10] sm:$0xff]
    %v69 = vld [vmem:[%s1 + $0x18] sm:$0xff]
    %v70 = vld [vmem:[%s1 + $0x20] sm:$0xff]
    %v71 = vld [vmem:[%s1 + $0x28] sm:$0xff]
    %v72 = vld [vmem:[%s1 + $0x30] sm:$0xff]
    %v73 = vld [vmem:[%s1 + $0x38] sm:$0xff]
    %75 = vset.pattern.permute.xlu0 0
    %76 = vperm.xlu0 %75, %v66
    %v77 = vpop.permute.xlu0 %76
    %80 = vset.pattern.permute.xlu0 0
    %81 = vperm.xlu0 %80, %v67
    %v82 = vpop.permute.xlu0 %81
    %85 = vset.pattern.permute.xlu0 0
    %86 = vperm.xlu0 %85, %v68
    %v87 = vpop.permute.xlu0 %86
    %90 = vset.pattern.permute.xlu0 0
    %91 = vperm.xlu0 %90, %v69
    %v92 = vpop.permute.xlu0 %91
    %95 = vset.pattern.permute.xlu0 0
    %96 = vperm.xlu0 %95, %v70
    %v97 = vpop.permute.xlu0 %96
    %100 = vset.pattern.permute.xlu0 0
    %101 = vperm.xlu0 %100, %v71
    %v102 = vpop.permute.xlu0 %101
    %105 = vset.pattern.permute.xlu0 0
    %106 = vperm.xlu0 %105, %v72
    %v107 = vpop.permute.xlu0 %106
    %110 = vset.pattern.permute.xlu0 0
    %111 = vperm.xlu0 %110, %v73
    %v112 = vpop.permute.xlu0 %111
    %v114 = vmul.f32 %v77, %v58
    %v115 = vmul.f32 %v82, %v59
    %v116 = vmul.f32 %v87, %v60
    %v117 = vmul.f32 %v92, %v61
    %v118 = vmul.f32 %v97, %v62
    %v119 = vmul.f32 %v102, %v63
    %v120 = vmul.f32 %v107, %v64
    %v121 = vmul.f32 %v112, %v65
    %v122 = vadd.f32 %v114, 0.0
    %v123 = vadd.f32 %v115, 0.0
    %v124 = vadd.f32 %v116, 0.0
    %v125 = vadd.f32 %v117, 0.0
    %v126 = vadd.f32 %v118, 0.0
    %v127 = vadd.f32 %v119, 0.0
    %v128 = vadd.f32 %v120, 0.0
    %v129 = vadd.f32 %v121, 0.0
    %130 = vset.pattern.permute.xlu0 1
    %131 = vperm.xlu0 %130, %v66
    %v132 = vpop.permute.xlu0 %131
    %134 = vset.pattern.permute.xlu0 1
    %135 = vperm.xlu0 %134, %v67
    %v136 = vpop.permute.xlu0 %135
    %138 = vset.pattern.permute.xlu0 1
    %139 = vperm.xlu0 %138, %v68
    %v140 = vpop.permute.xlu0 %139
    %142 = vset.pattern.permute.xlu0 1
    %143 = vperm.xlu0 %142, %v69
    %v144 = vpop.permute.xlu0 %143
    %146 = vset.pattern.permute.xlu0 1
    %147 = vperm.xlu0 %146, %v70
    %v148 = vpop.permute.xlu0 %147
    %150 = vset.pattern.permute.xlu0 1
    %151 = vperm.xlu0 %150, %v71
    %v152 = vpop.permute.xlu0 %151
    %154 = vset.pattern.permute.xlu0 1
    %155 = vperm.xlu0 %154, %v72
    %v156 = vpop.permute.xlu0 %155
    %158 = vset.pattern.permute.xlu0 1
    %159 = vperm.xlu0 %158, %v73
    %v160 = vpop.permute.xlu0 %159
    %v162 = vmul.f32 %v132, %v58
    %v163 = vmul.f32 %v136, %v59
    %v164 = vmul.f32 %v140, %v60
    %v165 = vmul.f32 %v144, %v61
    %v166 = vmul.f32 %v148, %v62
    %v167 = vmul.f32 %v152, %v63
    %v168 = vmul.f32 %v156, %v64
    %v169 = vmul.f32 %v160, %v65
    %178 = vrot.lane.b32.xlu0 %v162, 127
    %v179 = vpop.permute.xlu0 %178
    %180 = vrot.lane.b32.xlu0 %v163, 127
    %v181 = vpop.permute.xlu0 %180
    %182 = vrot.lane.b32.xlu0 %v164, 127
    %v183 = vpop.permute.xlu0 %182
    %184 = vrot.lane.b32.xlu0 %v165, 127
    %v185 = vpop.permute.xlu0 %184
    %186 = vrot.lane.b32.xlu0 %v166, 127
    %v187 = vpop.permute.xlu0 %186
    %188 = vrot.lane.b32.xlu0 %v167, 127
    %v189 = vpop.permute.xlu0 %188
    %190 = vrot.lane.b32.xlu0 %v168, 127
    %v191 = vpop.permute.xlu0 %190
    %192 = vrot.lane.b32.xlu0 %v169, 127
    %v193 = vpop.permute.xlu0 %192
    %v202 = vadd.f32 %v122, %v179
    %v203 = vadd.f32 %v123, %v181
    %v204 = vadd.f32 %v124, %v183
    %v205 = vadd.f32 %v125, %v185
    %v206 = vadd.f32 %v126, %v187
    %v207 = vadd.f32 %v127, %v189
    %v208 = vadd.f32 %v128, %v191
    %v209 = vadd.f32 %v129, %v193
    %210 = vset.pattern.permute.xlu0 2
    %211 = vperm.xlu0 %210, %v66
    %v212 = vpop.permute.xlu0 %211
    %214 = vset.pattern.permute.xlu0 2
    %215 = vperm.xlu0 %214, %v67
    %v216 = vpop.permute.xlu0 %215
    %218 = vset.pattern.permute.xlu0 2
    %219 = vperm.xlu0 %218, %v68
    %v220 = vpop.permute.xlu0 %219
    %222 = vset.pattern.permute.xlu0 2
    %223 = vperm.xlu0 %222, %v69
    %v224 = vpop.permute.xlu0 %223
    %226 = vset.pattern.permute.xlu0 2
    %227 = vperm.xlu0 %226, %v70
    %v228 = vpop.permute.xlu0 %227
    %230 = vset.pattern.permute.xlu0 2
    %231 = vperm.xlu0 %230, %v71
    %v232 = vpop.permute.xlu0 %231
    %234 = vset.pattern.permute.xlu0 2
    %235 = vperm.xlu0 %234, %v72
    %v236 = vpop.permute.xlu0 %235
    %238 = vset.pattern.permute.xlu0 2
    %239 = vperm.xlu0 %238, %v73
    %v240 = vpop.permute.xlu0 %239
    %v242 = vmul.f32 %v212, %v58
    %v243 = vmul.f32 %v216, %v59
    %v244 = vmul.f32 %v220, %v60
    %v245 = vmul.f32 %v224, %v61
    %v246 = vmul.f32 %v228, %v62
    %v247 = vmul.f32 %v232, %v63
    %v248 = vmul.f32 %v236, %v64
    %v249 = vmul.f32 %v240, %v65
    %258 = vrot.lane.b32.xlu0 %v242, 126
    %v259 = vpop.permute.xlu0 %258
    %260 = vrot.lane.b32.xlu0 %v243, 126
    %v261 = vpop.permute.xlu0 %260
    %262 = vrot.lane.b32.xlu0 %v244, 126
    %v263 = vpop.permute.xlu0 %262
    %264 = vrot.lane.b32.xlu0 %v245, 126
    %v265 = vpop.permute.xlu0 %264
    %266 = vrot.lane.b32.xlu0 %v246, 126
    %v267 = vpop.permute.xlu0 %266
    %268 = vrot.lane.b32.xlu0 %v247, 126
    %v269 = vpop.permute.xlu0 %268
    %270 = vrot.lane.b32.xlu0 %v248, 126
    %v271 = vpop.permute.xlu0 %270
    %272 = vrot.lane.b32.xlu0 %v249, 126
    %v273 = vpop.permute.xlu0 %272
    %v282 = vadd.f32 %v202, %v259
    %v283 = vadd.f32 %v203, %v261
    %v284 = vadd.f32 %v204, %v263
    %v285 = vadd.f32 %v205, %v265
    %v286 = vadd.f32 %v206, %v267
    %v287 = vadd.f32 %v207, %v269
    %v288 = vadd.f32 %v208, %v271
    %v289 = vadd.f32 %v209, %v273
    %v290 = vld [vmem:[#allocation3] sm:$0x1f]
    %v291 = vld [vmem:[#allocation3 + $0x8] sm:$0x1f]
    %v292 = vld [vmem:[%s4] sm:$0xff]
    %v293 = vld [vmem:[%s4 + $0x8] sm:$0xff]
    %v294 = vld [vmem:[%s4 + $0x10] sm:$0xff]
    %v295 = vld [vmem:[%s4 + $0x18] sm:$0xff]
    %v296 = vld [vmem:[%s4 + $0x20] sm:$0xff]
    %v297 = vld [vmem:[%s4 + $0x28] sm:$0xff]
    %v298 = vld [vmem:[%s4 + $0x30] sm:$0xff]
    %v299 = vld [vmem:[%s4 + $0x38] sm:$0xff]
    %v300 = vld [vmem:[%s4 + $0x40] sm:$0xff]
    %v301 = vld [vmem:[%s4 + $0x48] sm:$0xff]
    %v302 = vld [vmem:[%s4 + $0x50] sm:$0xff]
    %v303 = vld [vmem:[%s4 + $0x58] sm:$0xff]
    %v304 = vld [vmem:[%s4 + $0x60] sm:$0xff]
    %v305 = vld [vmem:[%s4 + $0x68] sm:$0xff]
    %v306 = vld [vmem:[%s4 + $0x70] sm:$0xff]
    %v307 = vld [vmem:[%s4 + $0x78] sm:$0xff]
    %vm308 = vcmask 39936
    %v310 = vsel %vm308, %v282, 0
    %v313 = vsel %vm308, %v283, 0
    %v316 = vsel %vm308, %v284, 0
    %v319 = vsel %vm308, %v285, 0
    %v322 = vsel %vm308, %v286, 0
    %v325 = vsel %vm308, %v287, 0
    %v328 = vsel %vm308, %v288, 0
    %v331 = vsel %vm308, %v289, 0
    %vm333 = vcmask 1044480
    %v335 = vsel %vm333, %v290, 0
    %v338 = vsel %vm333, %v291, 0
    %340 = vmatpush.msra.mxu0 0.0
    %341 = vmatpush.msra.mxu0 0.0
    %342 = vmatpush.msra.mxu0 0.0
    %343 = vmatpush.msra.mxu0 0.0
    %344 = vmatpush.msra.mxu0 0.0
    %345 = vmatpush.msra.mxu0 0.0
    %346 = vmatpush.msra.mxu0 0.0
    %347 = vmatpush.msra.mxu0 0.0
    %348 = vmatpush.msra.mxu0 0.0
    %349 = vmatpush.msra.mxu0 0.0
    %350 = vmatpush.msra.mxu0 0.0
    %351 = vmatpush.msra.mxu0 0.0
    %352 = vmatpush.msra.mxu0 0.0
    %353 = vmatpush.msra.mxu0 0.0
    %354 = vmatpush.msra.mxu0 0.0
    %355 = vmatpush.msra.mxu0 %v335
    %356 = vmatmul.f32.gmra.mxu0 %v310
    %v357 = vpop.f32.mrf.mxu0
    %v358 = vadd.f32 %v292, %v357
    %359 = vmatmul.f32.gmra.mxu0 %v313
    %v360 = vpop.f32.mrf.mxu0
    %v361 = vadd.f32 %v294, %v360
    %362 = vmatmul.f32.gmra.mxu0 %v316
    %v363 = vpop.f32.mrf.mxu0
    %v364 = vadd.f32 %v296, %v363
    %365 = vmatmul.f32.gmra.mxu0 %v319
    %v366 = vpop.f32.mrf.mxu0
    %v367 = vadd.f32 %v298, %v366
    %368 = vmatmul.f32.gmra.mxu0 %v322
    %v369 = vpop.f32.mrf.mxu0
    %v370 = vadd.f32 %v300, %v369
    %371 = vmatmul.f32.gmra.mxu0 %v325
    %v372 = vpop.f32.mrf.mxu0
    %v373 = vadd.f32 %v302, %v372
    %374 = vmatmul.f32.gmra.mxu0 %v328
    %v375 = vpop.f32.mrf.mxu0
    %v376 = vadd.f32 %v304, %v375
    %377 = vmatmul.f32.gmra.mxu0 %v331
    %v378 = vpop.f32.mrf.mxu0
    %v379 = vadd.f32 %v306, %v378
    %380 = vdwg.mxu0
    %381 = vmatpush.msra.mxu0 0.0
    %382 = vmatpush.msra.mxu0 0.0
    %383 = vmatpush.msra.mxu0 0.0
    %384 = vmatpush.msra.mxu0 0.0
    %385 = vmatpush.msra.mxu0 0.0
    %386 = vmatpush.msra.mxu0 0.0
    %387 = vmatpush.msra.mxu0 0.0
    %388 = vmatpush.msra.mxu0 0.0
    %389 = vmatpush.msra.mxu0 0.0
    %390 = vmatpush.msra.mxu0 0.0
    %391 = vmatpush.msra.mxu0 0.0
    %392 = vmatpush.msra.mxu0 0.0
    %393 = vmatpush.msra.mxu0 0.0
    %394 = vmatpush.msra.mxu0 0.0
    %395 = vmatpush.msra.mxu0 0.0
    %396 = vmatpush.msra.mxu0 %v338
    %397 = vmatmul.f32.gmra.mxu0 %v310
    %v398 = vpop.f32.mrf.mxu0
    %v399 = vadd.f32 %v293, %v398
    %400 = vmatmul.f32.gmra.mxu0 %v313
    %v401 = vpop.f32.mrf.mxu0
    %v402 = vadd.f32 %v295, %v401
    %403 = vmatmul.f32.gmra.mxu0 %v316
    %v404 = vpop.f32.mrf.mxu0
    %v405 = vadd.f32 %v297, %v404
    %406 = vmatmul.f32.gmra.mxu0 %v319
    %v407 = vpop.f32.mrf.mxu0
    %v408 = vadd.f32 %v299, %v407
    %409 = vmatmul.f32.gmra.mxu0 %v322
    %v410 = vpop.f32.mrf.mxu0
    %v411 = vadd.f32 %v301, %v410
    %412 = vmatmul.f32.gmra.mxu0 %v325
    %v413 = vpop.f32.mrf.mxu0
    %v414 = vadd.f32 %v303, %v413
    %415 = vmatmul.f32.gmra.mxu0 %v328
    %v416 = vpop.f32.mrf.mxu0
    %v417 = vadd.f32 %v305, %v416
    %418 = vmatmul.f32.gmra.mxu0 %v331
    %v419 = vpop.f32.mrf.mxu0
    %v420 = vadd.f32 %v307, %v419
    %421 = vdwg.mxu0
    %v422 = vld [vmem:[#allocation5] sm:$0xff]
    %v423 = vld [vmem:[#allocation5 + $0x8] sm:$0xff]
    %v424 = vld [vmem:[#allocation5 + $0x10] sm:$0xff]
    %v425 = vld [vmem:[#allocation5 + $0x18] sm:$0xff]
    %v426 = vld [vmem:[#allocation5 + $0x20] sm:$0xff]
    %v427 = vld [vmem:[#allocation5 + $0x28] sm:$0xff]
    %v428 = vld [vmem:[#allocation5 + $0x30] sm:$0xff]
    %v429 = vld [vmem:[#allocation5 + $0x38] sm:$0xff]
    %v430 = vld [vmem:[#allocation5 + $0x40] sm:$0xff]
    %v431 = vld [vmem:[#allocation5 + $0x48] sm:$0xff]
    %v432 = vld [vmem:[#allocation5 + $0x50] sm:$0xff]
    %v433 = vld [vmem:[#allocation5 + $0x58] sm:$0xff]
    %v434 = vxor.u32 %v358, 2147483648
    %v435 = vmul.f32 %v434, 1.442695
    %v436 = vpow.pop %v435
    %v437 = vadd.f32 %v436, 1.0
    %v438 = vrcp.pop %v437
    %v439 = vmul.f32 %v437, %v438
    %v440 = vsub.f32 1.0, %v439
    %v441 = vmul.f32 %v438, %v440
    %v442 = vadd.f32 %v438, %v441
    %vm443 = vweird.f32 %v437
    %vm444 = vweird.f32 %v438
    %vm445 = vmor %vm443, %vm444
    %v446 = vsel %vm445, %v438, %v442
    %v447 = vand.u32 2147483647, %v437
    %vm448 = vcmp.eq.f32.partialorder %v447, 8.507059e+37
    %v449 = vand.u32 %v437, 2147483648
    %v450 = vor.u32 1.1754944e-38, %v449
    %v451 = vsel %vm448, %v450, %v446
    %v452 = vmul.f32 1.0, %v451
    %v453 = vtanh.pop %v399
    %v454 = vmul.f32 %v452, 0.0
    %456 = vrot.lane.b32.xlu0 %v453, 112
    %v457 = vpop.permute.xlu0 %456
    %v459 = vmul.f32 %v452, %v457
    %461 = vrot.lane.b32.xlu0 %v459, 48
    %v462 = vpop.permute.xlu0 %461
    %v464 = vadd.f32 %v454, %v462
    %v465 = vxor.u32 %v399, 2147483648
    %v466 = vmul.f32 %v465, 1.442695
    %v467 = vpow.pop %v466
    %v468 = vadd.f32 %v467, 1.0
    %v469 = vrcp.pop %v468
    %v470 = vmul.f32 %v468, %v469
    %v471 = vsub.f32 1.0, %v470
    %v472 = vmul.f32 %v469, %v471
    %v473 = vadd.f32 %v469, %v472
    %vm474 = vweird.f32 %v468
    %vm475 = vweird.f32 %v469
    %vm476 = vmor %vm474, %vm475
    %v477 = vsel %vm476, %v469, %v473
    %v478 = vand.u32 2147483647, %v468
    %vm479 = vcmp.eq.f32.partialorder %v478, 8.507059e+37
    %v480 = vand.u32 %v468, 2147483648
    %v481 = vor.u32 1.1754944e-38, %v480
    %v482 = vsel %vm479, %v481, %v477
    %v483 = vmul.f32 1.0, %v482
    %v484 = vtanh.pop %v464
    %486 = vrot.lane.b32.xlu0 %v484, 48
    %v487 = vpop.permute.xlu0 %486
    %v489 = vmul.f32 %v452, %v487
    %v490 = vmul.f32 %v483, %v487
    %493 = vrot.lane.b32.xlu0 %v489, 32
    %v494 = vpop.permute.xlu0 %493
    %495 = vrot.lane.b32.xlu0 %v490, 32
    %v496 = vpop.permute.xlu0 %495
    %vm497 = vcmask 261120
    %v498 = vsel %vm497, %v494, %v496
    %vm499 = vcmask 392192
    %v500 = vsel %vm499, %v498, 0
    %502 = vmatpush.msra.mxu0 0.0
    %503 = vmatpush.msra.mxu0 0.0
    %504 = vmatpush.msra.mxu0 0.0
    %505 = vmatpush.msra.mxu0 0.0
    %506 = vmatpush.msra.mxu0 0.0
    %507 = vmatpush.msra.mxu0 0.0
    %508 = vmatpush.msra.mxu0 0.0
    %509 = vmatpush.msra.mxu0 0.0
    %510 = vmatpush.msra.mxu0 0.0
    %511 = vmatpush.msra.mxu0 0.0
    %512 = vmatpush.msra.mxu0 %v432
    %513 = vmatpush.msra.mxu0 %v430
    %514 = vmatpush.msra.mxu0 %v428
    %515 = vmatpush.msra.mxu0 %v426
    %516 = vmatpush.msra.mxu0 %v424
    %517 = vmatpush.msra.mxu0 %v422
    %518 = vmatmul.f32.gmra.mxu0 %v500
    %v519 = vpop.f32.mrf.mxu0
    %v520 = vadd.f32 0.0, %v519
    %521 = vdwg.mxu0
    %522 = vmatpush.msra.mxu0 0.0
    %523 = vmatpush.msra.mxu0 0.0
    %524 = vmatpush.msra.mxu0 0.0
    %525 = vmatpush.msra.mxu0 0.0
    %526 = vmatpush.msra.mxu0 0.0
    %527 = vmatpush.msra.mxu0 0.0
    %528 = vmatpush.msra.mxu0 0.0
    %529 = vmatpush.msra.mxu0 0.0
    %530 = vmatpush.msra.mxu0 0.0
    %531 = vmatpush.msra.mxu0 0.0
    %532 = vmatpush.msra.mxu0 %v433
    %533 = vmatpush.msra.mxu0 %v431
    %534 = vmatpush.msra.mxu0 %v429
    %535 = vmatpush.msra.mxu0 %v427
    %536 = vmatpush.msra.mxu0 %v425
    %537 = vmatpush.msra.mxu0 %v423
    %538 = vmatmul.f32.gmra.mxu0 %v500
    %v539 = vpop.f32.mrf.mxu0
    %v540 = vadd.f32 0.0, %v539
    %541 = vdwg.mxu0
    %v542 = vadd.f32 %v361, %v520
    %v543 = vadd.f32 %v402, %v540
    %v544 = vxor.u32 %v542, 2147483648
    %v545 = vmul.f32 %v544, 1.442695
    %v546 = vpow.pop %v545
    %v547 = vadd.f32 %v546, 1.0
    %v548 = vrcp.pop %v547
    %v549 = vmul.f32 %v547, %v548
    %v550 = vsub.f32 1.0, %v549
    %v551 = vmul.f32 %v548, %v550
    %v552 = vadd.f32 %v548, %v551
    %vm553 = vweird.f32 %v547
    %vm554 = vweird.f32 %v548
    %vm555 = vmor %vm553, %vm554
    %v556 = vsel %vm555, %v548, %v552
    %v557 = vand.u32 2147483647, %v547
    %vm558 = vcmp.eq.f32.partialorder %v557, 8.507059e+37
    %v559 = vand.u32 %v547, 2147483648
    %v560 = vor.u32 1.1754944e-38, %v559
    %v561 = vsel %vm558, %v560, %v556
    %v562 = vmul.f32 1.0, %v561
    %v563 = vtanh.pop %v543
    %v564 = vmul.f32 %v562, %v464
    %566 = vrot.lane.b32.xlu0 %v563, 112
    %v567 = vpop.permute.xlu0 %566
    %v569 = vmul.f32 %v562, %v567
    %571 = vrot.lane.b32.xlu0 %v569, 48
    %v572 = vpop.permute.xlu0 %571
    %v574 = vadd.f32 %v564, %v572
    %v575 = vxor.u32 %v543, 2147483648
    %v576 = vmul.f32 %v575, 1.442695
    %v577 = vpow.pop %v576
    %v578 = vadd.f32 %v577, 1.0
    %v579 = vrcp.pop %v578
    %v580 = vmul.f32 %v578, %v579
    %v581 = vsub.f32 1.0, %v580
    %v582 = vmul.f32 %v579, %v581
    %v583 = vadd.f32 %v579, %v582
    %vm584 = vweird.f32 %v578
    %vm585 = vweird.f32 %v579
    %vm586 = vmor %vm584, %vm585
    %v587 = vsel %vm586, %v579, %v583
    %v588 = vand.u32 2147483647, %v578
    %vm589 = vcmp.eq.f32.partialorder %v588, 8.507059e+37
    %v590 = vand.u32 %v578, 2147483648
    %v591 = vor.u32 1.1754944e-38, %v590
    %v592 = vsel %vm589, %v591, %v587
    %v593 = vmul.f32 1.0, %v592
    %v594 = vtanh.pop %v574
    %596 = vrot.lane.b32.xlu0 %v594, 48
    %v597 = vpop.permute.xlu0 %596
    %v599 = vmul.f32 %v562, %v597
    %v600 = vmul.f32 %v593, %v597
    %603 = vrot.lane.b32.xlu0 %v599, 32
    %v604 = vpop.permute.xlu0 %603
    %605 = vrot.lane.b32.xlu0 %v600, 32
    %v606 = vpop.permute.xlu0 %605
    %v607 = vsel %vm497, %v604, %v606
    %v608 = vsel %vm499, %v607, 0
    %610 = vmatpush.msra.mxu0 0.0
    %611 = vmatpush.msra.mxu0 0.0
    %612 = vmatpush.msra.mxu0 0.0
    %613 = vmatpush.msra.mxu0 0.0
    %614 = vmatpush.msra.mxu0 0.0
    %615 = vmatpush.msra.mxu0 0.0
    %616 = vmatpush.msra.mxu0 0.0
    %617 = vmatpush.msra.mxu0 0.0
    %618 = vmatpush.msra.mxu0 0.0
    %619 = vmatpush.msra.mxu0 0.0
    %620 = vmatpush.msra.mxu0 %v432
    %621 = vmatpush.msra.mxu0 %v430
    %622 = vmatpush.msra.mxu0 %v428
    %623 = vmatpush.msra.mxu0 %v426
    %624 = vmatpush.msra.mxu0 %v424
    %625 = vmatpush.msra.mxu0 %v422
    %626 = vmatmul.f32.gmra.mxu0 %v608
    %v627 = vpop.f32.mrf.mxu0
    %v628 = vadd.f32 0.0, %v627
    %629 = vdwg.mxu0
    %630 = vmatpush.msra.mxu0 0.0
    %631 = vmatpush.msra.mxu0 0.0
    %632 = vmatpush.msra.mxu0 0.0
    %633 = vmatpush.msra.mxu0 0.0
    %634 = vmatpush.msra.mxu0 0.0
    %635 = vmatpush.msra.mxu0 0.0
    %636 = vmatpush.msra.mxu0 0.0
    %637 = vmatpush.msra.mxu0 0.0
    %638 = vmatpush.msra.mxu0 0.0
    %639 = vmatpush.msra.mxu0 0.0
    %640 = vmatpush.msra.mxu0 %v433
    %641 = vmatpush.msra.mxu0 %v431
    %642 = vmatpush.msra.mxu0 %v429
    %643 = vmatpush.msra.mxu0 %v427
    %644 = vmatpush.msra.mxu0 %v425
    %645 = vmatpush.msra.mxu0 %v423
    %646 = vmatmul.f32.gmra.mxu0 %v608
    %v647 = vpop.f32.mrf.mxu0
    %v648 = vadd.f32 0.0, %v647
    %649 = vdwg.mxu0
    %v650 = vadd.f32 %v364, %v628
    %v651 = vadd.f32 %v405, %v648
    %v652 = vxor.u32 %v650, 2147483648
    %v653 = vmul.f32 %v652, 1.442695
    %v654 = vpow.pop %v653
    %v655 = vadd.f32 %v654, 1.0
    %v656 = vrcp.pop %v655
    %v657 = vmul.f32 %v655, %v656
    %v658 = vsub.f32 1.0, %v657
    %v659 = vmul.f32 %v656, %v658
    %v660 = vadd.f32 %v656, %v659
    %vm661 = vweird.f32 %v655
    %vm662 = vweird.f32 %v656
    %vm663 = vmor %vm661, %vm662
    %v664 = vsel %vm663, %v656, %v660
    %v665 = vand.u32 2147483647, %v655
    %vm666 = vcmp.eq.f32.partialorder %v665, 8.507059e+37
    %v667 = vand.u32 %v655, 2147483648
    %v668 = vor.u32 1.1754944e-38, %v667
    %v669 = vsel %vm666, %v668, %v664
    %v670 = vmul.f32 1.0, %v669
    %v671 = vtanh.pop %v651
    %v672 = vmul.f32 %v670, %v574
    %674 = vrot.lane.b32.xlu0 %v671, 112
    %v675 = vpop.permute.xlu0 %674
    %v677 = vmul.f32 %v670, %v675
    %679 = vrot.lane.b32.xlu0 %v677, 48
    %v680 = vpop.permute.xlu0 %679
    %v682 = vadd.f32 %v672, %v680
    %v683 = vxor.u32 %v651, 2147483648
    %v684 = vmul.f32 %v683, 1.442695
    %v685 = vpow.pop %v684
    %v686 = vadd.f32 %v685, 1.0
    %v687 = vrcp.pop %v686
    %v688 = vmul.f32 %v686, %v687
    %v689 = vsub.f32 1.0, %v688
    %v690 = vmul.f32 %v687, %v689
    %v691 = vadd.f32 %v687, %v690
    %vm692 = vweird.f32 %v686
    %vm693 = vweird.f32 %v687
    %vm694 = vmor %vm692, %vm693
    %v695 = vsel %vm694, %v687, %v691
    %v696 = vand.u32 2147483647, %v686
    %vm697 = vcmp.eq.f32.partialorder %v696, 8.507059e+37
    %v698 = vand.u32 %v686, 2147483648
    %v699 = vor.u32 1.1754944e-38, %v698
    %v700 = vsel %vm697, %v699, %v695
    %v701 = vmul.f32 1.0, %v700
    %v702 = vtanh.pop %v682
    %704 = vrot.lane.b32.xlu0 %v702, 48
    %v705 = vpop.permute.xlu0 %704
    %v707 = vmul.f32 %v670, %v705
    %v708 = vmul.f32 %v701, %v705
    %711 = vrot.lane.b32.xlu0 %v707, 32
    %v712 = vpop.permute.xlu0 %711
    %713 = vrot.lane.b32.xlu0 %v708, 32
    %v714 = vpop.permute.xlu0 %713
    %v715 = vsel %vm497, %v712, %v714
    %v716 = vsel %vm499, %v715, 0
    %718 = vmatpush.msra.mxu0 0.0
    %719 = vmatpush.msra.mxu0 0.0
    %720 = vmatpush.msra.mxu0 0.0
    %721 = vmatpush.msra.mxu0 0.0
    %722 = vmatpush.msra.mxu0 0.0
    %723 = vmatpush.msra.mxu0 0.0
    %724 = vmatpush.msra.mxu0 0.0
    %725 = vmatpush.msra.mxu0 0.0
    %726 = vmatpush.msra.mxu0 0.0
    %727 = vmatpush.msra.mxu0 0.0
    %728 = vmatpush.msra.mxu0 %v432
    %729 = vmatpush.msra.mxu0 %v430
    %730 = vmatpush.msra.mxu0 %v428
    %731 = vmatpush.msra.mxu0 %v426
    %732 = vmatpush.msra.mxu0 %v424
    %733 = vmatpush.msra.mxu0 %v422
    %734 = vmatmul.f32.gmra.mxu0 %v716
    %v735 = vpop.f32.mrf.mxu0
    %v736 = vadd.f32 0.0, %v735
    %737 = vdwg.mxu0
    %738 = vmatpush.msra.mxu0 0.0
    %739 = vmatpush.msra.mxu0 0.0
    %740 = vmatpush.msra.mxu0 0.0
    %741 = vmatpush.msra.mxu0 0.0
    %742 = vmatpush.msra.mxu0 0.0
    %743 = vmatpush.msra.mxu0 0.0
    %744 = vmatpush.msra.mxu0 0.0
    %745 = vmatpush.msra.mxu0 0.0
    %746 = vmatpush.msra.mxu0 0.0
    %747 = vmatpush.msra.mxu0 0.0
    %748 = vmatpush.msra.mxu0 %v433
    %749 = vmatpush.msra.mxu0 %v431
    %750 = vmatpush.msra.mxu0 %v429
    %751 = vmatpush.msra.mxu0 %v427
    %752 = vmatpush.msra.mxu0 %v425
    %753 = vmatpush.msra.mxu0 %v423
    %754 = vmatmul.f32.gmra.mxu0 %v716
    %v755 = vpop.f32.mrf.mxu0
    %v756 = vadd.f32 0.0, %v755
    %757 = vdwg.mxu0
    %v758 = vadd.f32 %v367, %v736
    %v759 = vadd.f32 %v408, %v756
    %v760 = vxor.u32 %v758, 2147483648
    %v761 = vmul.f32 %v760, 1.442695
    %v762 = vpow.pop %v761
    %v763 = vadd.f32 %v762, 1.0
    %v764 = vrcp.pop %v763
    %v765 = vmul.f32 %v763, %v764
    %v766 = vsub.f32 1.0, %v765
    %v767 = vmul.f32 %v764, %v766
    %v768 = vadd.f32 %v764, %v767
    %vm769 = vweird.f32 %v763
    %vm770 = vweird.f32 %v764
    %vm771 = vmor %vm769, %vm770
    %v772 = vsel %vm771, %v764, %v768
    %v773 = vand.u32 2147483647, %v763
    %vm774 = vcmp.eq.f32.partialorder %v773, 8.507059e+37
    %v775 = vand.u32 %v763, 2147483648
    %v776 = vor.u32 1.1754944e-38, %v775
    %v777 = vsel %vm774, %v776, %v772
    %v778 = vmul.f32 1.0, %v777
    %v779 = vtanh.pop %v759
    %v780 = vmul.f32 %v778, %v682
    %782 = vrot.lane.b32.xlu0 %v779, 112
    %v783 = vpop.permute.xlu0 %782
    %v785 = vmul.f32 %v778, %v783
    %787 = vrot.lane.b32.xlu0 %v785, 48
    %v788 = vpop.permute.xlu0 %787
    %v790 = vadd.f32 %v780, %v788
    %v791 = vxor.u32 %v759, 2147483648
    %v792 = vmul.f32 %v791, 1.442695
    %v793 = vpow.pop %v792
    %v794 = vadd.f32 %v793, 1.0
    %v795 = vrcp.pop %v794
    %v796 = vmul.f32 %v794, %v795
    %v797 = vsub.f32 1.0, %v796
    %v798 = vmul.f32 %v795, %v797
    %v799 = vadd.f32 %v795, %v798
    %vm800 = vweird.f32 %v794
    %vm801 = vweird.f32 %v795
    %vm802 = vmor %vm800, %vm801
    %v803 = vsel %vm802, %v795, %v799
    %v804 = vand.u32 2147483647, %v794
    %vm805 = vcmp.eq.f32.partialorder %v804, 8.507059e+37
    %v806 = vand.u32 %v794, 2147483648
    %v807 = vor.u32 1.1754944e-38, %v806
    %v808 = vsel %vm805, %v807, %v803
    %v809 = vmul.f32 1.0, %v808
    %v810 = vtanh.pop %v790
    %812 = vrot.lane.b32.xlu0 %v810, 48
    %v813 = vpop.permute.xlu0 %812
    %v815 = vmul.f32 %v778, %v813
    %v816 = vmul.f32 %v809, %v813
    %819 = vrot.lane.b32.xlu0 %v815, 32
    %v820 = vpop.permute.xlu0 %819
    %821 = vrot.lane.b32.xlu0 %v816, 32
    %v822 = vpop.permute.xlu0 %821
    %v823 = vsel %vm497, %v820, %v822
    %v824 = vsel %vm499, %v823, 0
    %826 = vmatpush.msra.mxu0 0.0
    %827 = vmatpush.msra.mxu0 0.0
    %828 = vmatpush.msra.mxu0 0.0
    %829 = vmatpush.msra.mxu0 0.0
    %830 = vmatpush.msra.mxu0 0.0
    %831 = vmatpush.msra.mxu0 0.0
    %832 = vmatpush.msra.mxu0 0.0
    %833 = vmatpush.msra.mxu0 0.0
    %834 = vmatpush.msra.mxu0 0.0
    %835 = vmatpush.msra.mxu0 0.0
    %836 = vmatpush.msra.mxu0 %v432
    %837 = vmatpush.msra.mxu0 %v430
    %838 = vmatpush.msra.mxu0 %v428
    %839 = vmatpush.msra.mxu0 %v426
    %840 = vmatpush.msra.mxu0 %v424
    %841 = vmatpush.msra.mxu0 %v422
    %842 = vmatmul.f32.gmra.mxu0 %v824
    %v843 = vpop.f32.mrf.mxu0
    %v844 = vadd.f32 0.0, %v843
    %845 = vdwg.mxu0
    %846 = vmatpush.msra.mxu0 0.0
    %847 = vmatpush.msra.mxu0 0.0
    %848 = vmatpush.msra.mxu0 0.0
    %849 = vmatpush.msra.mxu0 0.0
    %850 = vmatpush.msra.mxu0 0.0
    %851 = vmatpush.msra.mxu0 0.0
    %852 = vmatpush.msra.mxu0 0.0
    %853 = vmatpush.msra.mxu0 0.0
    %854 = vmatpush.msra.mxu0 0.0
    %855 = vmatpush.msra.mxu0 0.0
    %856 = vmatpush.msra.mxu0 %v433
    %857 = vmatpush.msra.mxu0 %v431
    %858 = vmatpush.msra.mxu0 %v429
    %859 = vmatpush.msra.mxu0 %v427
    %860 = vmatpush.msra.mxu0 %v425
    %861 = vmatpush.msra.mxu0 %v423
    %862 = vmatmul.f32.gmra.mxu0 %v824
    %v863 = vpop.f32.mrf.mxu0
    %v864 = vadd.f32 0.0, %v863
    %865 = vdwg.mxu0
    %v866 = vadd.f32 %v370, %v844
    %v867 = vadd.f32 %v411, %v864
    %v868 = vxor.u32 %v866, 2147483648
    %v869 = vmul.f32 %v868, 1.442695
    %v870 = vpow.pop %v869
    %v871 = vadd.f32 %v870, 1.0
    %v872 = vrcp.pop %v871
    %v873 = vmul.f32 %v871, %v872
    %v874 = vsub.f32 1.0, %v873
    %v875 = vmul.f32 %v872, %v874
    %v876 = vadd.f32 %v872, %v875
    %vm877 = vweird.f32 %v871
    %vm878 = vweird.f32 %v872
    %vm879 = vmor %vm877, %vm878
    %v880 = vsel %vm879, %v872, %v876
    %v881 = vand.u32 2147483647, %v871
    %vm882 = vcmp.eq.f32.partialorder %v881, 8.507059e+37
    %v883 = vand.u32 %v871, 2147483648
    %v884 = vor.u32 1.1754944e-38, %v883
    %v885 = vsel %vm882, %v884, %v880
    %v886 = vmul.f32 1.0, %v885
    %v887 = vtanh.pop %v867
    %v888 = vmul.f32 %v886, %v790
    %890 = vrot.lane.b32.xlu0 %v887, 112
    %v891 = vpop.permute.xlu0 %890
    %v893 = vmul.f32 %v886, %v891
    %895 = vrot.lane.b32.xlu0 %v893, 48
    %v896 = vpop.permute.xlu0 %895
    %v898 = vadd.f32 %v888, %v896
    %v899 = vxor.u32 %v867, 2147483648
    %v900 = vmul.f32 %v899, 1.442695
    %v901 = vpow.pop %v900
    %v902 = vadd.f32 %v901, 1.0
    %v903 = vrcp.pop %v902
    %v904 = vmul.f32 %v902, %v903
    %v905 = vsub.f32 1.0, %v904
    %v906 = vmul.f32 %v903, %v905
    %v907 = vadd.f32 %v903, %v906
    %vm908 = vweird.f32 %v902
    %vm909 = vweird.f32 %v903
    %vm910 = vmor %vm908, %vm909
    %v911 = vsel %vm910, %v903, %v907
    %v912 = vand.u32 2147483647, %v902
    %vm913 = vcmp.eq.f32.partialorder %v912, 8.507059e+37
    %v914 = vand.u32 %v902, 2147483648
    %v915 = vor.u32 1.1754944e-38, %v914
    %v916 = vsel %vm913, %v915, %v911
    %v917 = vmul.f32 1.0, %v916
    %v918 = vtanh.pop %v898
    %920 = vrot.lane.b32.xlu0 %v918, 48
    %v921 = vpop.permute.xlu0 %920
    %v923 = vmul.f32 %v886, %v921
    %v924 = vmul.f32 %v917, %v921
    %927 = vrot.lane.b32.xlu0 %v923, 32
    %v928 = vpop.permute.xlu0 %927
    %929 = vrot.lane.b32.xlu0 %v924, 32
    %v930 = vpop.permute.xlu0 %929
    %v931 = vsel %vm497, %v928, %v930
    %v932 = vsel %vm499, %v931, 0
    %934 = vmatpush.msra.mxu0 0.0
    %935 = vmatpush.msra.mxu0 0.0
    %936 = vmatpush.msra.mxu0 0.0
    %937 = vmatpush.msra.mxu0 0.0
    %938 = vmatpush.msra.mxu0 0.0
    %939 = vmatpush.msra.mxu0 0.0
    %940 = vmatpush.msra.mxu0 0.0
    %941 = vmatpush.msra.mxu0 0.0
    %942 = vmatpush.msra.mxu0 0.0
    %943 = vmatpush.msra.mxu0 0.0
    %944 = vmatpush.msra.mxu0 %v432
    %945 = vmatpush.msra.mxu0 %v430
    %946 = vmatpush.msra.mxu0 %v428
    %947 = vmatpush.msra.mxu0 %v426
    %948 = vmatpush.msra.mxu0 %v424
    %949 = vmatpush.msra.mxu0 %v422
    %950 = vmatmul.f32.gmra.mxu0 %v932
    %v951 = vpop.f32.mrf.mxu0
    %v952 = vadd.f32 0.0, %v951
    %953 = vdwg.mxu0
    %954 = vmatpush.msra.mxu0 0.0
    %955 = vmatpush.msra.mxu0 0.0
    %956 = vmatpush.msra.mxu0 0.0
    %957 = vmatpush.msra.mxu0 0.0
    %958 = vmatpush.msra.mxu0 0.0
    %959 = vmatpush.msra.mxu0 0.0
    %960 = vmatpush.msra.mxu0 0.0
    %961 = vmatpush.msra.mxu0 0.0
    %962 = vmatpush.msra.mxu0 0.0
    %963 = vmatpush.msra.mxu0 0.0
    %964 = vmatpush.msra.mxu0 %v433
    %965 = vmatpush.msra.mxu0 %v431
    %966 = vmatpush.msra.mxu0 %v429
    %967 = vmatpush.msra.mxu0 %v427
    %968 = vmatpush.msra.mxu0 %v425
    %969 = vmatpush.msra.mxu0 %v423
    %970 = vmatmul.f32.gmra.mxu0 %v932
    %v971 = vpop.f32.mrf.mxu0
    %v972 = vadd.f32 0.0, %v971
    %973 = vdwg.mxu0
    %v974 = vadd.f32 %v373, %v952
    %v975 = vadd.f32 %v414, %v972
    %v976 = vxor.u32 %v974, 2147483648
    %v977 = vmul.f32 %v976, 1.442695
    %v978 = vpow.pop %v977
    %v979 = vadd.f32 %v978, 1.0
    %v980 = vrcp.pop %v979
    %v981 = vmul.f32 %v979, %v980
    %v982 = vsub.f32 1.0, %v981
    %v983 = vmul.f32 %v980, %v982
    %v984 = vadd.f32 %v980, %v983
    %vm985 = vweird.f32 %v979
    %vm986 = vweird.f32 %v980
    %vm987 = vmor %vm985, %vm986
    %v988 = vsel %vm987, %v980, %v984
    %v989 = vand.u32 2147483647, %v979
    %vm990 = vcmp.eq.f32.partialorder %v989, 8.507059e+37
    %v991 = vand.u32 %v979, 2147483648
    %v992 = vor.u32 1.1754944e-38, %v991
    %v993 = vsel %vm990, %v992, %v988
    %v994 = vmul.f32 1.0, %v993
    %v995 = vtanh.pop %v975
    %v996 = vmul.f32 %v994, %v898
    %998 = vrot.lane.b32.xlu0 %v995, 112
    %v999 = vpop.permute.xlu0 %998
    %v1001 = vmul.f32 %v994, %v999
    %1003 = vrot.lane.b32.xlu0 %v1001, 48
    %v1004 = vpop.permute.xlu0 %1003
    %v1006 = vadd.f32 %v996, %v1004
    %v1007 = vxor.u32 %v975, 2147483648
    %v1008 = vmul.f32 %v1007, 1.442695
    %v1009 = vpow.pop %v1008
    %v1010 = vadd.f32 %v1009, 1.0
    %v1011 = vrcp.pop %v1010
    %v1012 = vmul.f32 %v1010, %v1011
    %v1013 = vsub.f32 1.0, %v1012
    %v1014 = vmul.f32 %v1011, %v1013
    %v1015 = vadd.f32 %v1011, %v1014
    %vm1016 = vweird.f32 %v1010
    %vm1017 = vweird.f32 %v1011
    %vm1018 = vmor %vm1016, %vm1017
    %v1019 = vsel %vm1018, %v1011, %v1015
    %v1020 = vand.u32 2147483647, %v1010
    %vm1021 = vcmp.eq.f32.partialorder %v1020, 8.507059e+37
    %v1022 = vand.u32 %v1010, 2147483648
    %v1023 = vor.u32 1.1754944e-38, %v1022
    %v1024 = vsel %vm1021, %v1023, %v1019
    %v1025 = vmul.f32 1.0, %v1024
    %v1026 = vtanh.pop %v1006
    %1028 = vrot.lane.b32.xlu0 %v1026, 48
    %v1029 = vpop.permute.xlu0 %1028
    %v1031 = vmul.f32 %v994, %v1029
    %v1032 = vmul.f32 %v1025, %v1029
    %1035 = vrot.lane.b32.xlu0 %v1031, 32
    %v1036 = vpop.permute.xlu0 %1035
    %1037 = vrot.lane.b32.xlu0 %v1032, 32
    %v1038 = vpop.permute.xlu0 %1037
    %v1039 = vsel %vm497, %v1036, %v1038
    %v1040 = vsel %vm499, %v1039, 0
    %1042 = vmatpush.msra.mxu0 0.0
    %1043 = vmatpush.msra.mxu0 0.0
    %1044 = vmatpush.msra.mxu0 0.0
    %1045 = vmatpush.msra.mxu0 0.0
    %1046 = vmatpush.msra.mxu0 0.0
    %1047 = vmatpush.msra.mxu0 0.0
    %1048 = vmatpush.msra.mxu0 0.0
    %1049 = vmatpush.msra.mxu0 0.0
    %1050 = vmatpush.msra.mxu0 0.0
    %1051 = vmatpush.msra.mxu0 0.0
    %1052 = vmatpush.msra.mxu0 %v432
    %1053 = vmatpush.msra.mxu0 %v430
    %1054 = vmatpush.msra.mxu0 %v428
    %1055 = vmatpush.msra.mxu0 %v426
    %1056 = vmatpush.msra.mxu0 %v424
    %1057 = vmatpush.msra.mxu0 %v422
    %1058 = vmatmul.f32.gmra.mxu0 %v1040
    %v1059 = vpop.f32.mrf.mxu0
    %v1060 = vadd.f32 0.0, %v1059
    %1061 = vdwg.mxu0
    %1062 = vmatpush.msra.mxu0 0.0
    %1063 = vmatpush.msra.mxu0 0.0
    %1064 = vmatpush.msra.mxu0 0.0
    %1065 = vmatpush.msra.mxu0 0.0
    %1066 = vmatpush.msra.mxu0 0.0
    %1067 = vmatpush.msra.mxu0 0.0
    %1068 = vmatpush.msra.mxu0 0.0
    %1069 = vmatpush.msra.mxu0 0.0
    %1070 = vmatpush.msra.mxu0 0.0
    %1071 = vmatpush.msra.mxu0 0.0
    %1072 = vmatpush.msra.mxu0 %v433
    %1073 = vmatpush.msra.mxu0 %v431
    %1074 = vmatpush.msra.mxu0 %v429
    %1075 = vmatpush.msra.mxu0 %v427
    %1076 = vmatpush.msra.mxu0 %v425
    %1077 = vmatpush.msra.mxu0 %v423
    %1078 = vmatmul.f32.gmra.mxu0 %v1040
    %v1079 = vpop.f32.mrf.mxu0
    %v1080 = vadd.f32 0.0, %v1079
    %1081 = vdwg.mxu0
    %v1082 = vadd.f32 %v376, %v1060
    %v1083 = vadd.f32 %v417, %v1080
    %v1084 = vxor.u32 %v1082, 2147483648
    %v1085 = vmul.f32 %v1084, 1.442695
    %v1086 = vpow.pop %v1085
    %v1087 = vadd.f32 %v1086, 1.0
    %v1088 = vrcp.pop %v1087
    %v1089 = vmul.f32 %v1087, %v1088
    %v1090 = vsub.f32 1.0, %v1089
    %v1091 = vmul.f32 %v1088, %v1090
    %v1092 = vadd.f32 %v1088, %v1091
    %vm1093 = vweird.f32 %v1087
    %vm1094 = vweird.f32 %v1088
    %vm1095 = vmor %vm1093, %vm1094
    %v1096 = vsel %vm1095, %v1088, %v1092
    %v1097 = vand.u32 2147483647, %v1087
    %vm1098 = vcmp.eq.f32.partialorder %v1097, 8.507059e+37
    %v1099 = vand.u32 %v1087, 2147483648
    %v1100 = vor.u32 1.1754944e-38, %v1099
    %v1101 = vsel %vm1098, %v1100, %v1096
    %v1102 = vmul.f32 1.0, %v1101
    %v1103 = vtanh.pop %v1083
    %v1104 = vmul.f32 %v1102, %v1006
    %1106 = vrot.lane.b32.xlu0 %v1103, 112
    %v1107 = vpop.permute.xlu0 %1106
    %v1109 = vmul.f32 %v1102, %v1107
    %1111 = vrot.lane.b32.xlu0 %v1109, 48
    %v1112 = vpop.permute.xlu0 %1111
    %v1114 = vadd.f32 %v1104, %v1112
    %v1115 = vxor.u32 %v1083, 2147483648
    %v1116 = vmul.f32 %v1115, 1.442695
    %v1117 = vpow.pop %v1116
    %v1118 = vadd.f32 %v1117, 1.0
    %v1119 = vrcp.pop %v1118
    %v1120 = vmul.f32 %v1118, %v1119
    %v1121 = vsub.f32 1.0, %v1120
    %v1122 = vmul.f32 %v1119, %v1121
    %v1123 = vadd.f32 %v1119, %v1122
    %vm1124 = vweird.f32 %v1118
    %vm1125 = vweird.f32 %v1119
    %vm1126 = vmor %vm1124, %vm1125
    %v1127 = vsel %vm1126, %v1119, %v1123
    %v1128 = vand.u32 2147483647, %v1118
    %vm1129 = vcmp.eq.f32.partialorder %v1128, 8.507059e+37
    %v1130 = vand.u32 %v1118, 2147483648
    %v1131 = vor.u32 1.1754944e-38, %v1130
    %v1132 = vsel %vm1129, %v1131, %v1127
    %v1133 = vmul.f32 1.0, %v1132
    %v1134 = vtanh.pop %v1114
    %1136 = vrot.lane.b32.xlu0 %v1134, 48
    %v1137 = vpop.permute.xlu0 %1136
    %v1139 = vmul.f32 %v1102, %v1137
    %v1140 = vmul.f32 %v1133, %v1137
    %1143 = vrot.lane.b32.xlu0 %v1139, 32
    %v1144 = vpop.permute.xlu0 %1143
    %1145 = vrot.lane.b32.xlu0 %v1140, 32
    %v1146 = vpop.permute.xlu0 %1145
    %v1147 = vsel %vm497, %v1144, %v1146
    %v1148 = vsel %vm499, %v1147, 0
    %1150 = vmatpush.msra.mxu0 0.0
    %1151 = vmatpush.msra.mxu0 0.0
    %1152 = vmatpush.msra.mxu0 0.0
    %1153 = vmatpush.msra.mxu0 0.0
    %1154 = vmatpush.msra.mxu0 0.0
    %1155 = vmatpush.msra.mxu0 0.0
    %1156 = vmatpush.msra.mxu0 0.0
    %1157 = vmatpush.msra.mxu0 0.0
    %1158 = vmatpush.msra.mxu0 0.0
    %1159 = vmatpush.msra.mxu0 0.0
    %1160 = vmatpush.msra.mxu0 %v432
    %1161 = vmatpush.msra.mxu0 %v430
    %1162 = vmatpush.msra.mxu0 %v428
    %1163 = vmatpush.msra.mxu0 %v426
    %1164 = vmatpush.msra.mxu0 %v424
    %1165 = vmatpush.msra.mxu0 %v422
    %1166 = vmatmul.f32.gmra.mxu0 %v1148
    %v1167 = vpop.f32.mrf.mxu0
    %v1168 = vadd.f32 0.0, %v1167
    %1169 = vdwg.mxu0
    %1170 = vmatpush.msra.mxu0 0.0
    %1171 = vmatpush.msra.mxu0 0.0
    %1172 = vmatpush.msra.mxu0 0.0
    %1173 = vmatpush.msra.mxu0 0.0
    %1174 = vmatpush.msra.mxu0 0.0
    %1175 = vmatpush.msra.mxu0 0.0
    %1176 = vmatpush.msra.mxu0 0.0
    %1177 = vmatpush.msra.mxu0 0.0
    %1178 = vmatpush.msra.mxu0 0.0
    %1179 = vmatpush.msra.mxu0 0.0
    %1180 = vmatpush.msra.mxu0 %v433
    %1181 = vmatpush.msra.mxu0 %v431
    %1182 = vmatpush.msra.mxu0 %v429
    %1183 = vmatpush.msra.mxu0 %v427
    %1184 = vmatpush.msra.mxu0 %v425
    %1185 = vmatpush.msra.mxu0 %v423
    %1186 = vmatmul.f32.gmra.mxu0 %v1148
    %v1187 = vpop.f32.mrf.mxu0
    %v1188 = vadd.f32 0.0, %v1187
    %1189 = vdwg.mxu0
    %v1190 = vadd.f32 %v379, %v1168
    %v1191 = vadd.f32 %v420, %v1188
    %v1192 = vxor.u32 %v1190, 2147483648
    %v1193 = vmul.f32 %v1192, 1.442695
    %v1194 = vpow.pop %v1193
    %v1195 = vadd.f32 %v1194, 1.0
    %v1196 = vrcp.pop %v1195
    %v1197 = vmul.f32 %v1195, %v1196
    %v1198 = vsub.f32 1.0, %v1197
    %v1199 = vmul.f32 %v1196, %v1198
    %v1200 = vadd.f32 %v1196, %v1199
    %vm1201 = vweird.f32 %v1195
    %vm1202 = vweird.f32 %v1196
    %vm1203 = vmor %vm1201, %vm1202
    %v1204 = vsel %vm1203, %v1196, %v1200
    %v1205 = vand.u32 2147483647, %v1195
    %vm1206 = vcmp.eq.f32.partialorder %v1205, 8.507059e+37
    %v1207 = vand.u32 %v1195, 2147483648
    %v1208 = vor.u32 1.1754944e-38, %v1207
    %v1209 = vsel %vm1206, %v1208, %v1204
    %v1210 = vmul.f32 1.0, %v1209
    %v1211 = vtanh.pop %v1191
    %v1212 = vmul.f32 %v1210, %v1114
    %1214 = vrot.lane.b32.xlu0 %v1211, 112
    %v1215 = vpop.permute.xlu0 %1214
    %v1217 = vmul.f32 %v1210, %v1215
    %1219 = vrot.lane.b32.xlu0 %v1217, 48
    %v1220 = vpop.permute.xlu0 %1219
    %v1222 = vadd.f32 %v1212, %v1220
    %v1223 = vxor.u32 %v1191, 2147483648
    %v1224 = vmul.f32 %v1223, 1.442695
    %v1225 = vpow.pop %v1224
    %v1226 = vadd.f32 %v1225, 1.0
    %v1227 = vrcp.pop %v1226
    %v1228 = vmul.f32 %v1226, %v1227
    %v1229 = vsub.f32 1.0, %v1228
    %v1230 = vmul.f32 %v1227, %v1229
    %v1231 = vadd.f32 %v1227, %v1230
    %vm1232 = vweird.f32 %v1226
    %vm1233 = vweird.f32 %v1227
    %vm1234 = vmor %vm1232, %vm1233
    %v1235 = vsel %vm1234, %v1227, %v1231
    %v1236 = vand.u32 2147483647, %v1226
    %vm1237 = vcmp.eq.f32.partialorder %v1236, 8.507059e+37
    %v1238 = vand.u32 %v1226, 2147483648
    %v1239 = vor.u32 1.1754944e-38, %v1238
    %v1240 = vsel %vm1237, %v1239, %v1235
    %v1241 = vmul.f32 1.0, %v1240
    %v1242 = vtanh.pop %v1222
    %1244 = vrot.lane.b32.xlu0 %v1242, 48
    %v1245 = vpop.permute.xlu0 %1244
    %v1247 = vmul.f32 %v1210, %v1245
    %v1248 = vmul.f32 %v1241, %v1245
    %v1249 = vld [vmem:[%s5] sm:$0xff]
    %1251 = vrot.lane.b32.xlu0 %v1249, 96
    %v1252 = vpop.permute.xlu0 %1251
    %v1254 = vmul.f32 %v489, %v1252
    %v1255 = vmul.f32 %v490, %v1252
    %v1256 = vmul.f32 %v599, %v1252
    %v1257 = vmul.f32 %v600, %v1252
    %v1258 = vmul.f32 %v707, %v1252
    %v1259 = vmul.f32 %v708, %v1252
    %v1260 = vmul.f32 %v815, %v1252
    %v1261 = vmul.f32 %v816, %v1252
    %v1262 = vmul.f32 %v923, %v1252
    %v1263 = vmul.f32 %v924, %v1252
    %v1264 = vmul.f32 %v1031, %v1252
    %v1265 = vmul.f32 %v1032, %v1252
    %v1266 = vmul.f32 %v1139, %v1252
    %v1267 = vmul.f32 %v1140, %v1252
    %v1268 = vmul.f32 %v1247, %v1252
    %v1269 = vmul.f32 %v1248, %v1252
    %1286 = vrot.lane.b32.xlu0 %v1254, 32
    %v1287 = vpop.permute.xlu0 %1286
    %1288 = vrot.lane.b32.xlu0 %v1255, 32
    %v1289 = vpop.permute.xlu0 %1288
    %1290 = vrot.lane.b32.xlu0 %v1256, 32
    %v1291 = vpop.permute.xlu0 %1290
    %1292 = vrot.lane.b32.xlu0 %v1257, 32
    %v1293 = vpop.permute.xlu0 %1292
    %1294 = vrot.lane.b32.xlu0 %v1258, 32
    %v1295 = vpop.permute.xlu0 %1294
    %1296 = vrot.lane.b32.xlu0 %v1259, 32
    %v1297 = vpop.permute.xlu0 %1296
    %1298 = vrot.lane.b32.xlu0 %v1260, 32
    %v1299 = vpop.permute.xlu0 %1298
    %1300 = vrot.lane.b32.xlu0 %v1261, 32
    %v1301 = vpop.permute.xlu0 %1300
    %1302 = vrot.lane.b32.xlu0 %v1262, 32
    %v1303 = vpop.permute.xlu0 %1302
    %1304 = vrot.lane.b32.xlu0 %v1263, 32
    %v1305 = vpop.permute.xlu0 %1304
    %1306 = vrot.lane.b32.xlu0 %v1264, 32
    %v1307 = vpop.permute.xlu0 %1306
    %1308 = vrot.lane.b32.xlu0 %v1265, 32
    %v1309 = vpop.permute.xlu0 %1308
    %1310 = vrot.lane.b32.xlu0 %v1266, 32
    %v1311 = vpop.permute.xlu0 %1310
    %1312 = vrot.lane.b32.xlu0 %v1267, 32
    %v1313 = vpop.permute.xlu0 %1312
    %1314 = vrot.lane.b32.xlu0 %v1268, 32
    %v1315 = vpop.permute.xlu0 %1314
    %1316 = vrot.lane.b32.xlu0 %v1269, 32
    %v1317 = vpop.permute.xlu0 %1316
    %v1318 = vsel %vm497, %v1287, %v1289
    %v1319 = vsel %vm497, %v1291, %v1293
    %v1320 = vsel %vm497, %v1295, %v1297
    %v1321 = vsel %vm497, %v1299, %v1301
    %v1322 = vsel %vm497, %v1303, %v1305
    %v1323 = vsel %vm497, %v1307, %v1309
    %v1324 = vsel %vm497, %v1311, %v1313
    %v1325 = vsel %vm497, %v1315, %v1317
    %v1334 = vsel %vm499, %v1318, 0.0
    %1335 = vadd.xlane.f32.xlu0 %v1334
    %v1336 = vpop.xlane.xlu0 %1335
    %v1337 = vsel %vm499, %v1319, 0.0
    %1338 = vadd.xlane.f32.xlu0 %v1337
    %v1339 = vpop.xlane.xlu0 %1338
    %v1340 = vsel %vm499, %v1320, 0.0
    %1341 = vadd.xlane.f32.xlu0 %v1340
    %v1342 = vpop.xlane.xlu0 %1341
    %v1343 = vsel %vm499, %v1321, 0.0
    %1344 = vadd.xlane.f32.xlu0 %v1343
    %v1345 = vpop.xlane.xlu0 %1344
    %v1346 = vsel %vm499, %v1322, 0.0
    %1347 = vadd.xlane.f32.xlu0 %v1346
    %v1348 = vpop.xlane.xlu0 %1347
    %v1349 = vsel %vm499, %v1323, 0.0
    %1350 = vadd.xlane.f32.xlu0 %v1349
    %v1351 = vpop.xlane.xlu0 %1350
    %v1352 = vsel %vm499, %v1324, 0.0
    %1353 = vadd.xlane.f32.xlu0 %v1352
    %v1354 = vpop.xlane.xlu0 %1353
    %v1355 = vsel %vm499, %v1325, 0.0
    %1356 = vadd.xlane.f32.xlu0 %v1355
    %v1357 = vpop.xlane.xlu0 %1356
    %v1366 = vlaneseq
    %v1367 = vand.u32 %v1366, 127
    %v1368 = vperm.slane %v1336, %v1367
    %v1369 = vperm.slane %v1339, %v1367
    %v1370 = vperm.slane %v1342, %v1367
    %v1371 = vperm.slane %v1345, %v1367
    %v1372 = vperm.slane %v1348, %v1367
    %v1373 = vperm.slane %v1351, %v1367
    %v1374 = vperm.slane %v1354, %v1367
    %v1375 = vperm.slane %v1357, %v1367
    %vm1376 = vcmask 1041409
    %v1377 = vsel %vm1376, %v1369, %v1368
    %vm1378 = vcmask 1042434
    %v1379 = vsel %vm1378, %v1370, %v1377
    %vm1380 = vcmask 1043459
    %v1381 = vsel %vm1380, %v1371, %v1379
    %vm1382 = vcmask 1044484
    %v1383 = vsel %vm1382, %v1372, %v1381
    %vm1384 = vcmask 1045509
    %v1385 = vsel %vm1384, %v1373, %v1383
    %vm1386 = vcmask 1046534
    %v1387 = vsel %vm1386, %v1374, %v1385
    %vm1388 = vcmask 1047559
    %v1389 = vsel %vm1388, %v1375, %v1387
    %vm1391 = vcmask 64512
    %v1392 = vsel %vm1391, %v1389, 0.0
    %1393 = vadd.xlane.f32.xlu0 %v1392
    %v1394 = vpop.xlane.xlu0 %1393
    %v1395 = vld [vmem:[#allocation2] sm:$0x1]
    %v1397 = vperm.slane %v1395, 0
    %v1399 = vadd.f32 %v1394, %v1397
    %vm1400 = vcmask 7168
    %1401 = vst.msk [vmem:[%s7] sm:$0xff] %vm1400, %v1399
    // Predicated region
    $region38: #{tpu_custom_call.1} parent=1 // pred_check
      _
    $region39: #{tpu_custom_call.1} parent=1 // pred_check_branch
      %1403 = sbr.rel (0) target = $region41
    $region40: #{tpu_custom_call.1} parent=1 // pred_region
      _
    $region41: #{tpu_custom_call.1} parent=1 // pred_fallthru
      _
    // Predicated region
    $region42: #{tpu_custom_call.1} parent=1 // pred_check
      _
    $region43: #{tpu_custom_call.1} parent=1 // pred_check_branch
      %1405 = sbr.rel (0) target = $region45
    $region44: #{tpu_custom_call.1} parent=1 // pred_region
      _
    $region45: #{tpu_custom_call.1} parent=1 // pred_fallthru
      _
    %1406 = vsyncpa [#allocation4], 1
    %1407 = vsyncpa [#allocation6], 1

</llo_original>
